<compile_context>
chip_gen: v5e
topology: v5e:2x2
jax: 0.10.0
libtpu: 0.0.40
codegen_flags: <defaults>
</compile_context>

<pallas_src>
import math

import jax
import jax.numpy as jnp
from jax.experimental import pallas as pl
from jax.experimental.pallas import tpu as pltpu


def _gru_attn_kernel(x_ref, w_ih_ref, w_hh_ref, bias_ref, b_hn_ref,
                     attn_w_ref, attn_b_ref, sess_ref, gi_scr, gout_scr):
    """GRU over time + attention pooling for one batch tile.

    x_ref:      (S, TB, E)   bf16 time-major embedded items (one batch tile)
    w_ih_ref:   (E, 3H)      bf16 input->gate weights, gate order [r, z, n]
    w_hh_ref:   (H, 3H)      bf16 hidden->gate weights
    bias_ref:   (1, 3H)      f32  b_ih + [b_hh_r, b_hh_z, 0]
    b_hn_ref:   (1, H)       f32  hidden bias of the candidate gate (stays
                                  inside r*(.) to match PyTorch GRU)
    attn_w_ref: (1, H)       f32  attention scoring vector
    attn_b_ref: (1, 1)       f32  attention bias
    sess_ref:   (TB, H)      bf16 output session representation
    gi_scr:     (S, TB, 3H)  f32  scratch: hoisted input projections
    gout_scr:   (S, TB, H)   f32  scratch: all GRU hidden states
    """
    S, TB, E = x_ref.shape
    H = w_hh_ref.shape[0]

    # ---- Hoisted input projection: one (S*TB, E) @ (E, 3H) bf16 MXU matmul
    # (f32 acc) instead of S tiny latency-bound matmuls on the serial chain.
    x_flat = x_ref[...].reshape(S * TB, E)
    gi_all = jnp.dot(x_flat, w_ih_ref[...],
                     preferred_element_type=jnp.float32) + bias_ref[...]
    gi_scr[...] = gi_all.reshape(S, TB, 3 * H)

    w_hh = w_hh_ref[...]                       # bf16 (H, 3H)
    b_hn = b_hn_ref[...]                       # f32  (1, H)

    # ---- Recurrence: only h @ w_hh remains serial.  S is small and static,
    # so fully unroll (scheduler cross-step visibility).  TB <= 64 keeps the
    # per-step live set inside the 64-vreg file (no spills on the serial path).
    h = jnp.zeros((TB, H), dtype=jnp.float32)
    for t in range(S):
        gi_t = gi_scr[t]                                              # (TB, 3H)
        gh = jnp.dot(h.astype(jnp.bfloat16), w_hh,
                     preferred_element_type=jnp.float32)              # (TB, 3H)
        r = jax.nn.sigmoid(gi_t[:, 0:H] + gh[:, 0:H])
        z = jax.nn.sigmoid(gi_t[:, H:2 * H] + gh[:, H:2 * H])
        n = jnp.tanh(gi_t[:, 2 * H:] + r * (gh[:, 2 * H:] + b_hn))
        h = n + z * (h - n)                                           # (1-z)*n + z*h
        gout_scr[t] = h

    # ---- Attention pooling over time (softmax over S), lane-shaped reductions:
    # the reduced dim stays a size-1 lane so no lane<->sublane relayouts.
    gru_all = gout_scr[...]                                           # (S, TB, H)
    attn_w = attn_w_ref[...]                                          # (1, H)
    scores = jnp.sum(gru_all * attn_w[None, :, :], axis=-1,
                     keepdims=True) + attn_b_ref[0, 0]                # (S, TB, 1)
    m = jnp.max(scores, axis=0, keepdims=True)                        # (1, TB, 1)
    e = jnp.exp(scores - m)                                           # (S, TB, 1)
    inv_den = pl.reciprocal(jnp.sum(e, axis=0, keepdims=True), approx=True)
    w = e * inv_den                                                   # (S, TB, 1)
    session = jnp.sum(gru_all * w, axis=0)                            # (TB, H)
    sess_ref[...] = session.astype(sess_ref.dtype)


def _output_proj_kernel(sess_ref, w_out_ref, b_out_ref, logits_ref):
    """One (TB, H) @ (H, TN) tile of the output projection (bf16 MXU, f32 acc)."""
    logits_ref[...] = (
        jnp.dot(sess_ref[...], w_out_ref[...],
                preferred_element_type=jnp.float32) + b_out_ref[...])


def session_recommender_forward(sequences, params):
    """sequences: (B, S) int32 item ids. Returns logits (B, num_items) f32."""
    H = params["w_hh"].shape[0]
    N = params["w_out"].shape[1]

    # Embedding gather (glue), straight into bf16 time-major (S, B, E): halves
    # the intermediate's HBM traffic; the MXU input is bf16 anyway.
    x = params["item_embedding"][sequences.T].astype(jnp.bfloat16)    # (S, B, E)
    S, B, E = x.shape

    # Fold biases: b_ih + b_hh can be pre-added for the r/z gates; the n-gate
    # hidden bias must stay inside r*(.) to match PyTorch GRU semantics.
    bias = params["b_ih"] + jnp.concatenate(
        [params["b_hh"][:, :2 * H], jnp.zeros((1, H), jnp.float32)], axis=1)
    b_hn = params["b_hh"][:, 2 * H:]

    # ---- Tile selection --------------------------------------------------
    # Kernel-1 batch tile: cap at 64 (bounds vreg pressure in the unrolled
    # recurrence); produce >=2 tiles when B >= 17 so v7x's two TCs both work.
    if B <= 16:
        TB1 = B
    else:
        TB1 = min(64, -(-((B + 1) // 2) // 8) * 8)     # round up to mult of 8
    # Kernel-2 batch tile: 256 fills the 256-wide MXU on v6e/v7x (two passes
    # on v5e's 128x128 MXU, still correct); otherwise 128.
    if B <= 128:
        TB2 = B
    elif B % 256 == 0:
        TB2 = 256
    else:
        TB2 = 128
    # Kernel-2 item tile: big tiles amortize per-step overhead; ~6 MiB
    # double-buffered working set at TN=4096 fits the 32 MiB scoped VMEM.
    TN = N if N <= 4096 else 4096

    # ---- Kernel 1: GRU + attention pooling, gridded over batch tiles.
    session = pl.pallas_call(
        _gru_attn_kernel,
        out_shape=jax.ShapeDtypeStruct((B, H), jnp.bfloat16),
        grid_spec=pltpu.PrefetchScalarGridSpec(
            num_scalar_prefetch=0,
            grid=(pl.cdiv(B, TB1),),
            in_specs=[
                pl.BlockSpec((S, TB1, E), lambda b: (0, b, 0)),
                pl.BlockSpec((E, 3 * H), lambda b: (0, 0)),
                pl.BlockSpec((H, 3 * H), lambda b: (0, 0)),
                pl.BlockSpec((1, 3 * H), lambda b: (0, 0)),
                pl.BlockSpec((1, H), lambda b: (0, 0)),
                pl.BlockSpec((1, H), lambda b: (0, 0)),
                pl.BlockSpec((1, 1), lambda b: (0, 0)),
            ],
            out_specs=pl.BlockSpec((TB1, H), lambda b: (b, 0)),
            scratch_shapes=[pltpu.VMEM((S, TB1, 3 * H), jnp.float32),
                            pltpu.VMEM((S, TB1, H), jnp.float32)]),
        compiler_params=pltpu.CompilerParams(
            dimension_semantics=("parallel",),
            vmem_limit_bytes=32 * 1024 * 1024),
    )(x, params["w_ih"].astype(jnp.bfloat16),
      params["w_hh"].astype(jnp.bfloat16), bias, b_hn,
      params["attn_w"], params["attn_b"])

    # ---- Kernel 2: tiled output projection.  Item-tile axis OUTER, batch-tile
    # axis INNER with W_out's index_map constant along the inner axis, so each
    # W_out tile is streamed from HBM exactly once and stays resident while all
    # batch tiles sweep past it.
    logits = pl.pallas_call(
        _output_proj_kernel,
        out_shape=jax.ShapeDtypeStruct((B, N), jnp.float32),
        grid_spec=pltpu.PrefetchScalarGridSpec(
            num_scalar_prefetch=0,
            grid=(pl.cdiv(N, TN), pl.cdiv(B, TB2)),
            in_specs=[
                pl.BlockSpec((TB2, H), lambda n, b: (b, 0)),
                pl.BlockSpec((H, TN), lambda n, b: (0, n)),   # resident across inner axis
                pl.BlockSpec((1, TN), lambda n, b: (0, n)),
            ],
            out_specs=pl.BlockSpec((TB2, TN), lambda n, b: (b, n))),
        compiler_params=pltpu.CompilerParams(
            dimension_semantics=("parallel", "parallel"),
            vmem_limit_bytes=32 * 1024 * 1024),
    )(session, params["w_out"].astype(jnp.bfloat16), params["b_out"])
    return logits


def init_params(key, num_items, embedding_dim, hidden_dim):
    """Deterministic synthetic parameters matching the module's shapes."""
    ks = jax.random.split(key, 8)

    def xavier(k, fan_in, fan_out, shape):
        std = math.sqrt(2.0 / (fan_in + fan_out))
        return std * jax.random.normal(k, shape, dtype=jnp.float32)

    scale = 1.0 / math.sqrt(hidden_dim)
    emb = xavier(ks[0], num_items + 1, embedding_dim,
                 (num_items + 1, embedding_dim)).at[0].set(0.0)  # padding_idx=0
    return {
        # nn.Embedding(num_items + 1, E)
        "item_embedding": emb,
        # nn.GRU(E, H): weight_ih (3H, E) stored transposed, gate order r,z,n
        "w_ih": scale * jax.random.normal(ks[1], (embedding_dim, 3 * hidden_dim),
                                          dtype=jnp.float32),
        "w_hh": scale * jax.random.normal(ks[2], (hidden_dim, 3 * hidden_dim),
                                          dtype=jnp.float32),
        "b_ih": scale * jax.random.normal(ks[3], (1, 3 * hidden_dim),
                                          dtype=jnp.float32),
        "b_hh": scale * jax.random.normal(ks[4], (1, 3 * hidden_dim),
                                          dtype=jnp.float32),
        # nn.Linear(H, 1)
        "attn_w": xavier(ks[5], hidden_dim, 1, (1, hidden_dim)),
        "attn_b": jnp.zeros((1, 1), dtype=jnp.float32),
        # nn.Linear(H, num_items), stored transposed (H, N)
        "w_out": xavier(ks[6], hidden_dim, num_items, (hidden_dim, num_items)),
        "b_out": jnp.zeros((1, num_items), dtype=jnp.float32),
    }


def reference_forward(sequences, params):
    """Pure-JAX f32 reference of the PyTorch forward (eval mode, lengths=None)."""
    emb = params["item_embedding"][sequences].astype(jnp.float32)    # (B, S, E)
    B, S, _ = emb.shape
    H = params["w_hh"].shape[0]
    h = jnp.zeros((B, H), jnp.float32)
    outs = []
    for t in range(S):
        gi = emb[:, t, :] @ params["w_ih"] + params["b_ih"]
        gh = h @ params["w_hh"] + params["b_hh"]
        r = jax.nn.sigmoid(gi[:, :H] + gh[:, :H])
        z = jax.nn.sigmoid(gi[:, H:2 * H] + gh[:, H:2 * H])
        n = jnp.tanh(gi[:, 2 * H:] + r * gh[:, 2 * H:])
        h = (1.0 - z) * n + z * h
        outs.append(h)
    gru_out = jnp.stack(outs, axis=1)                                # (B, S, H)
    scores = jnp.sum(gru_out * params["attn_w"][None, :, :], axis=-1,
                     keepdims=True) + params["attn_b"][0, 0]         # (B, S, 1)
    w = jax.nn.softmax(scores, axis=1)
    session = jnp.sum(gru_out * w, axis=1)                           # (B, H)
    return session @ params["w_out"] + params["b_out"]


if __name__ == "__main__":
    NUM_ITEMS = 1024      # output projection exercises the tiled grid
    EMB_DIM = 128
    HIDDEN_DIM = 128
    BATCH = 8
    SEQ_LEN = 8

    key = jax.random.PRNGKey(0)
    k_param, k_seq = jax.random.split(key)
    params = init_params(k_param, NUM_ITEMS, EMB_DIM, HIDDEN_DIM)
    # item ids in [1, NUM_ITEMS]; 0 is the padding id
    sequences = jax.random.randint(k_seq, (BATCH, SEQ_LEN), 1, NUM_ITEMS + 1,
                                   dtype=jnp.int32)

    forward = jax.jit(session_recommender_forward)
    logits = jax.block_until_ready(forward(sequences, params))

    ref = jax.block_until_ready(reference_forward(sequences, params))
    assert logits.shape == (BATCH, NUM_ITEMS)
    assert jnp.allclose(logits, ref, rtol=2e-2, atol=2e-2), (
        f"max abs diff {jnp.max(jnp.abs(logits - ref))}")

    print("KERNEL_OK")
</pallas_src>

<mosaic_0001>
module attributes {stable_mosaic.version = 11 : i64} {
  func.func @_gru_attn_kernel(%arg0: i32, %arg1: memref<8x8x128xbf16, #tpu.memory_space<vmem>>, %arg2: memref<128x384xbf16, #tpu.memory_space<vmem>>, %arg3: memref<128x384xbf16, #tpu.memory_space<vmem>>, %arg4: memref<1x384xf32, #tpu.memory_space<vmem>>, %arg5: memref<1x128xf32, #tpu.memory_space<vmem>>, %arg6: memref<1x128xf32, #tpu.memory_space<vmem>>, %arg7: memref<1x1xf32, #tpu.memory_space<vmem>>, %arg8: memref<8x128xbf16, #tpu.memory_space<vmem>>, %arg9: memref<8x8x384xf32, #tpu.memory_space<vmem>>, %arg10: memref<8x8x128xf32, #tpu.memory_space<vmem>>) attributes {dimension_semantics = [#tpu.dimension_semantics<parallel>], iteration_bounds = array<i64: 1>, scalar_prefetch = 0 : i64, scratch_operands = 2 : i64, tpu.core_type = #tpu.core_type<tc>, window_params = [{transform_indices = @transform_0, window_bounds = array<i64: 8, 8, 128>}, {pipeline_mode = #tpu.pipeline_mode<synchronous>, transform_indices = @transform_1, window_bounds = array<i64: 128, 384>}, {pipeline_mode = #tpu.pipeline_mode<synchronous>, transform_indices = @transform_2, window_bounds = array<i64: 128, 384>}, {pipeline_mode = #tpu.pipeline_mode<synchronous>, transform_indices = @transform_3, window_bounds = array<i64: 1, 384>}, {pipeline_mode = #tpu.pipeline_mode<synchronous>, transform_indices = @transform_4, window_bounds = array<i64: 1, 128>}, {pipeline_mode = #tpu.pipeline_mode<synchronous>, transform_indices = @transform_5, window_bounds = array<i64: 1, 128>}, {pipeline_mode = #tpu.pipeline_mode<synchronous>, transform_indices = @transform_6, window_bounds = array<i64: 1, 1>}, {transform_indices = @transform_7, window_bounds = array<i64: 8, 128>}]} {
    %c0 = arith.constant 0 : index
    %c0_0 = arith.constant 0 : index
    %c0_1 = arith.constant 0 : index
    %0 = vector.load %arg1[%c0, %c0_0, %c0_1] : memref<8x8x128xbf16, #tpu.memory_space<vmem>>, vector<8x8x128xbf16>
    %1 = vector.shape_cast %0 : vector<8x8x128xbf16> to vector<64x128xbf16>
    %c0_2 = arith.constant 0 : index
    %c0_3 = arith.constant 0 : index
    %2 = vector.load %arg2[%c0_2, %c0_3] : memref<128x384xbf16, #tpu.memory_space<vmem>>, vector<128x384xbf16>
    %cst = arith.constant dense<0.000000e+00> : vector<64x384xf32>
    %3 = tpu.matmul %1, %2, %cst {dimension_numbers = #tpu.dot_dimension_numbers<[1], [0], [0], [1], [0, 0, 1, 1], [], []>} : vector<64x128xbf16>, vector<128x384xbf16>, vector<64x384xf32> -> vector<64x384xf32>
    %c0_4 = arith.constant 0 : index
    %c0_5 = arith.constant 0 : index
    %4 = vector.load %arg4[%c0_4, %c0_5] : memref<1x384xf32, #tpu.memory_space<vmem>>, vector<1x384xf32>
    %5 = vector.broadcast %4 : vector<1x384xf32> to vector<64x384xf32>
    %6 = arith.addf %3, %5 : vector<64x384xf32>
    %7 = vector.shape_cast %6 : vector<64x384xf32> to vector<8x8x384xf32>
    %c0_6 = arith.constant 0 : index
    %c0_7 = arith.constant 0 : index
    %c0_8 = arith.constant 0 : index
    %8 = vector.load %arg9[%c0_6, %c0_7, %c0_8] : memref<8x8x384xf32, #tpu.memory_space<vmem>>, vector<8x8x384xf32>
    tpu.vector_store %arg9[%c0_6, %c0_7, %c0_8], %7 {strides = array<i32>} : memref<8x8x384xf32, #tpu.memory_space<vmem>>, vector<8x8x384xf32>,
    %c0_9 = arith.constant 0 : index
    %c0_10 = arith.constant 0 : index
    %9 = vector.load %arg3[%c0_9, %c0_10] : memref<128x384xbf16, #tpu.memory_space<vmem>>, vector<128x384xbf16>
    %c0_11 = arith.constant 0 : index
    %c0_12 = arith.constant 0 : index
    %10 = vector.load %arg5[%c0_11, %c0_12] : memref<1x128xf32, #tpu.memory_space<vmem>>, vector<1x128xf32>
    %cst_13 = arith.constant 0.000000e+00 : f32
    %11 = vector.broadcast %cst_13 : f32 to vector<8x128xf32>
    %c0_14 = arith.constant 0 : index
    %c0_15 = arith.constant 0 : index
    %c0_16 = arith.constant 0 : index
    %12 = vector.load %arg9[%c0_14, %c0_15, %c0_16] : memref<8x8x384xf32, #tpu.memory_space<vmem>>, vector<1x8x384xf32>
    %13 = vector.shape_cast %12 : vector<1x8x384xf32> to vector<8x384xf32>
    %14 = arith.truncf %11 : vector<8x128xf32> to vector<8x128xbf16>
    %cst_17 = arith.constant dense<0.000000e+00> : vector<8x384xf32>
    %15 = tpu.matmul %14, %9, %cst_17 {dimension_numbers = #tpu.dot_dimension_numbers<[1], [0], [0], [1], [0, 0, 1, 1], [], []>} : vector<8x128xbf16>, vector<128x384xbf16>, vector<8x384xf32> -> vector<8x384xf32>
    %16 = vector.extract_strided_slice %13 {offsets = [0, 0], sizes = [8, 128], strides = [1, 1]} : vector<8x384xf32> to vector<8x128xf32>
    %17 = vector.extract_strided_slice %15 {offsets = [0, 0], sizes = [8, 128], strides = [1, 1]} : vector<8x384xf32> to vector<8x128xf32>
    %18 = arith.addf %16, %17 : vector<8x128xf32>
    %19 = arith.negf %18 : vector<8x128xf32>
    %20 = math.exp %19 : vector<8x128xf32>
    %cst_18 = arith.constant 1.000000e+00 : f32
    %21 = vector.broadcast %cst_18 : f32 to vector<8x128xf32>
    %22 = arith.addf %21, %20 : vector<8x128xf32>
    %23 = arith.divf %21, %22 : vector<8x128xf32>
    %24 = vector.extract_strided_slice %13 {offsets = [0, 128], sizes = [8, 128], strides = [1, 1]} : vector<8x384xf32> to vector<8x128xf32>
    %25 = vector.extract_strided_slice %15 {offsets = [0, 128], sizes = [8, 128], strides = [1, 1]} : vector<8x384xf32> to vector<8x128xf32>
    %26 = arith.addf %24, %25 : vector<8x128xf32>
    %27 = arith.negf %26 : vector<8x128xf32>
    %28 = math.exp %27 : vector<8x128xf32>
    %cst_19 = arith.constant 1.000000e+00 : f32
    %29 = vector.broadcast %cst_19 : f32 to vector<8x128xf32>
    %30 = arith.addf %29, %28 : vector<8x128xf32>
    %31 = arith.divf %29, %30 : vector<8x128xf32>
    %32 = vector.extract_strided_slice %13 {offsets = [0, 256], sizes = [8, 128], strides = [1, 1]} : vector<8x384xf32> to vector<8x128xf32>
    %33 = vector.extract_strided_slice %15 {offsets = [0, 256], sizes = [8, 128], strides = [1, 1]} : vector<8x384xf32> to vector<8x128xf32>
    %34 = vector.broadcast %10 : vector<1x128xf32> to vector<8x128xf32>
    %35 = arith.addf %33, %34 : vector<8x128xf32>
    %36 = arith.mulf %23, %35 : vector<8x128xf32>
    %37 = arith.addf %32, %36 : vector<8x128xf32>
    %38 = math.tanh %37 : vector<8x128xf32>
    %39 = arith.subf %11, %38 : vector<8x128xf32>
    %40 = arith.mulf %31, %39 : vector<8x128xf32>
    %41 = arith.addf %38, %40 : vector<8x128xf32>
    %c0_20 = arith.constant 0 : index
    %c0_21 = arith.constant 0 : index
    %c0_22 = arith.constant 0 : index
    %42 = vector.load %arg10[%c0_20, %c0_21, %c0_22] : memref<8x8x128xf32, #tpu.memory_space<vmem>>, vector<1x8x128xf32>
    %43 = vector.shape_cast %42 : vector<1x8x128xf32> to vector<8x128xf32>
    %44 = vector.shape_cast %41 : vector<8x128xf32> to vector<1x8x128xf32>
    tpu.vector_store %arg10[%c0_20, %c0_21, %c0_22], %44 {strides = array<i32>} : memref<8x8x128xf32, #tpu.memory_space<vmem>>, vector<1x8x128xf32>,
    %c1 = arith.constant 1 : index
    %c0_23 = arith.constant 0 : index
    %c0_24 = arith.constant 0 : index
    %45 = vector.load %arg9[%c1, %c0_23, %c0_24] : memref<8x8x384xf32, #tpu.memory_space<vmem>>, vector<1x8x384xf32>
    %46 = vector.shape_cast %45 : vector<1x8x384xf32> to vector<8x384xf32>
    %47 = arith.truncf %41 : vector<8x128xf32> to vector<8x128xbf16>
    %cst_25 = arith.constant dense<0.000000e+00> : vector<8x384xf32>
    %48 = tpu.matmul %47, %9, %cst_25 {dimension_numbers = #tpu.dot_dimension_numbers<[1], [0], [0], [1], [0, 0, 1, 1], [], []>} : vector<8x128xbf16>, vector<128x384xbf16>, vector<8x384xf32> -> vector<8x384xf32>
    %49 = vector.extract_strided_slice %46 {offsets = [0, 0], sizes = [8, 128], strides = [1, 1]} : vector<8x384xf32> to vector<8x128xf32>
    %50 = vector.extract_strided_slice %48 {offsets = [0, 0], sizes = [8, 128], strides = [1, 1]} : vector<8x384xf32> to vector<8x128xf32>
    %51 = arith.addf %49, %50 : vector<8x128xf32>
    %52 = arith.negf %51 : vector<8x128xf32>
    %53 = math.exp %52 : vector<8x128xf32>
    %cst_26 = arith.constant 1.000000e+00 : f32
    %54 = vector.broadcast %cst_26 : f32 to vector<8x128xf32>
    %55 = arith.addf %54, %53 : vector<8x128xf32>
    %56 = arith.divf %54, %55 : vector<8x128xf32>
    %57 = vector.extract_strided_slice %46 {offsets = [0, 128], sizes = [8, 128], strides = [1, 1]} : vector<8x384xf32> to vector<8x128xf32>
    %58 = vector.extract_strided_slice %48 {offsets = [0, 128], sizes = [8, 128], strides = [1, 1]} : vector<8x384xf32> to vector<8x128xf32>
    %59 = arith.addf %57, %58 : vector<8x128xf32>
    %60 = arith.negf %59 : vector<8x128xf32>
    %61 = math.exp %60 : vector<8x128xf32>
    %cst_27 = arith.constant 1.000000e+00 : f32
    %62 = vector.broadcast %cst_27 : f32 to vector<8x128xf32>
    %63 = arith.addf %62, %61 : vector<8x128xf32>
    %64 = arith.divf %62, %63 : vector<8x128xf32>
    %65 = vector.extract_strided_slice %46 {offsets = [0, 256], sizes = [8, 128], strides = [1, 1]} : vector<8x384xf32> to vector<8x128xf32>
    %66 = vector.extract_strided_slice %48 {offsets = [0, 256], sizes = [8, 128], strides = [1, 1]} : vector<8x384xf32> to vector<8x128xf32>
    %67 = vector.broadcast %10 : vector<1x128xf32> to vector<8x128xf32>
    %68 = arith.addf %66, %67 : vector<8x128xf32>
    %69 = arith.mulf %56, %68 : vector<8x128xf32>
    %70 = arith.addf %65, %69 : vector<8x128xf32>
    %71 = math.tanh %70 : vector<8x128xf32>
    %72 = arith.subf %41, %71 : vector<8x128xf32>
    %73 = arith.mulf %64, %72 : vector<8x128xf32>
    %74 = arith.addf %71, %73 : vector<8x128xf32>
    %c1_28 = arith.constant 1 : index
    %c0_29 = arith.constant 0 : index
    %c0_30 = arith.constant 0 : index
    %75 = vector.load %arg10[%c1_28, %c0_29, %c0_30] : memref<8x8x128xf32, #tpu.memory_space<vmem>>, vector<1x8x128xf32>
    %76 = vector.shape_cast %75 : vector<1x8x128xf32> to vector<8x128xf32>
    %77 = vector.shape_cast %74 : vector<8x128xf32> to vector<1x8x128xf32>
    tpu.vector_store %arg10[%c1_28, %c0_29, %c0_30], %77 {strides = array<i32>} : memref<8x8x128xf32, #tpu.memory_space<vmem>>, vector<1x8x128xf32>,
    %c2 = arith.constant 2 : index
    %c0_31 = arith.constant 0 : index
    %c0_32 = arith.constant 0 : index
    %78 = vector.load %arg9[%c2, %c0_31, %c0_32] : memref<8x8x384xf32, #tpu.memory_space<vmem>>, vector<1x8x384xf32>
    %79 = vector.shape_cast %78 : vector<1x8x384xf32> to vector<8x384xf32>
    %80 = arith.truncf %74 : vector<8x128xf32> to vector<8x128xbf16>
    %cst_33 = arith.constant dense<0.000000e+00> : vector<8x384xf32>
    %81 = tpu.matmul %80, %9, %cst_33 {dimension_numbers = #tpu.dot_dimension_numbers<[1], [0], [0], [1], [0, 0, 1, 1], [], []>} : vector<8x128xbf16>, vector<128x384xbf16>, vector<8x384xf32> -> vector<8x384xf32>
    %82 = vector.extract_strided_slice %79 {offsets = [0, 0], sizes = [8, 128], strides = [1, 1]} : vector<8x384xf32> to vector<8x128xf32>
    %83 = vector.extract_strided_slice %81 {offsets = [0, 0], sizes = [8, 128], strides = [1, 1]} : vector<8x384xf32> to vector<8x128xf32>
    %84 = arith.addf %82, %83 : vector<8x128xf32>
    %85 = arith.negf %84 : vector<8x128xf32>
    %86 = math.exp %85 : vector<8x128xf32>
    %cst_34 = arith.constant 1.000000e+00 : f32
    %87 = vector.broadcast %cst_34 : f32 to vector<8x128xf32>
    %88 = arith.addf %87, %86 : vector<8x128xf32>
    %89 = arith.divf %87, %88 : vector<8x128xf32>
    %90 = vector.extract_strided_slice %79 {offsets = [0, 128], sizes = [8, 128], strides = [1, 1]} : vector<8x384xf32> to vector<8x128xf32>
    %91 = vector.extract_strided_slice %81 {offsets = [0, 128], sizes = [8, 128], strides = [1, 1]} : vector<8x384xf32> to vector<8x128xf32>
    %92 = arith.addf %90, %91 : vector<8x128xf32>
    %93 = arith.negf %92 : vector<8x128xf32>
    %94 = math.exp %93 : vector<8x128xf32>
    %cst_35 = arith.constant 1.000000e+00 : f32
    %95 = vector.broadcast %cst_35 : f32 to vector<8x128xf32>
    %96 = arith.addf %95, %94 : vector<8x128xf32>
    %97 = arith.divf %95, %96 : vector<8x128xf32>
    %98 = vector.extract_strided_slice %79 {offsets = [0, 256], sizes = [8, 128], strides = [1, 1]} : vector<8x384xf32> to vector<8x128xf32>
    %99 = vector.extract_strided_slice %81 {offsets = [0, 256], sizes = [8, 128], strides = [1, 1]} : vector<8x384xf32> to vector<8x128xf32>
    %100 = vector.broadcast %10 : vector<1x128xf32> to vector<8x128xf32>
    %101 = arith.addf %99, %100 : vector<8x128xf32>
    %102 = arith.mulf %89, %101 : vector<8x128xf32>
    %103 = arith.addf %98, %102 : vector<8x128xf32>
    %104 = math.tanh %103 : vector<8x128xf32>
    %105 = arith.subf %74, %104 : vector<8x128xf32>
    %106 = arith.mulf %97, %105 : vector<8x128xf32>
    %107 = arith.addf %104, %106 : vector<8x128xf32>
    %c2_36 = arith.constant 2 : index
    %c0_37 = arith.constant 0 : index
    %c0_38 = arith.constant 0 : index
    %108 = vector.load %arg10[%c2_36, %c0_37, %c0_38] : memref<8x8x128xf32, #tpu.memory_space<vmem>>, vector<1x8x128xf32>
    %109 = vector.shape_cast %108 : vector<1x8x128xf32> to vector<8x128xf32>
    %110 = vector.shape_cast %107 : vector<8x128xf32> to vector<1x8x128xf32>
    tpu.vector_store %arg10[%c2_36, %c0_37, %c0_38], %110 {strides = array<i32>} : memref<8x8x128xf32, #tpu.memory_space<vmem>>, vector<1x8x128xf32>,
    %c3 = arith.constant 3 : index
    %c0_39 = arith.constant 0 : index
    %c0_40 = arith.constant 0 : index
    %111 = vector.load %arg9[%c3, %c0_39, %c0_40] : memref<8x8x384xf32, #tpu.memory_space<vmem>>, vector<1x8x384xf32>
    %112 = vector.shape_cast %111 : vector<1x8x384xf32> to vector<8x384xf32>
    %113 = arith.truncf %107 : vector<8x128xf32> to vector<8x128xbf16>
    %cst_41 = arith.constant dense<0.000000e+00> : vector<8x384xf32>
    %114 = tpu.matmul %113, %9, %cst_41 {dimension_numbers = #tpu.dot_dimension_numbers<[1], [0], [0], [1], [0, 0, 1, 1], [], []>} : vector<8x128xbf16>, vector<128x384xbf16>, vector<8x384xf32> -> vector<8x384xf32>
    %115 = vector.extract_strided_slice %112 {offsets = [0, 0], sizes = [8, 128], strides = [1, 1]} : vector<8x384xf32> to vector<8x128xf32>
    %116 = vector.extract_strided_slice %114 {offsets = [0, 0], sizes = [8, 128], strides = [1, 1]} : vector<8x384xf32> to vector<8x128xf32>
    %117 = arith.addf %115, %116 : vector<8x128xf32>
    %118 = arith.negf %117 : vector<8x128xf32>
    %119 = math.exp %118 : vector<8x128xf32>
    %cst_42 = arith.constant 1.000000e+00 : f32
    %120 = vector.broadcast %cst_42 : f32 to vector<8x128xf32>
    %121 = arith.addf %120, %119 : vector<8x128xf32>
    %122 = arith.divf %120, %121 : vector<8x128xf32>
    %123 = vector.extract_strided_slice %112 {offsets = [0, 128], sizes = [8, 128], strides = [1, 1]} : vector<8x384xf32> to vector<8x128xf32>
    %124 = vector.extract_strided_slice %114 {offsets = [0, 128], sizes = [8, 128], strides = [1, 1]} : vector<8x384xf32> to vector<8x128xf32>
    %125 = arith.addf %123, %124 : vector<8x128xf32>
    %126 = arith.negf %125 : vector<8x128xf32>
    %127 = math.exp %126 : vector<8x128xf32>
    %cst_43 = arith.constant 1.000000e+00 : f32
    %128 = vector.broadcast %cst_43 : f32 to vector<8x128xf32>
    %129 = arith.addf %128, %127 : vector<8x128xf32>
    %130 = arith.divf %128, %129 : vector<8x128xf32>
    %131 = vector.extract_strided_slice %112 {offsets = [0, 256], sizes = [8, 128], strides = [1, 1]} : vector<8x384xf32> to vector<8x128xf32>
    %132 = vector.extract_strided_slice %114 {offsets = [0, 256], sizes = [8, 128], strides = [1, 1]} : vector<8x384xf32> to vector<8x128xf32>
    %133 = vector.broadcast %10 : vector<1x128xf32> to vector<8x128xf32>
    %134 = arith.addf %132, %133 : vector<8x128xf32>
    %135 = arith.mulf %122, %134 : vector<8x128xf32>
    %136 = arith.addf %131, %135 : vector<8x128xf32>
    %137 = math.tanh %136 : vector<8x128xf32>
    %138 = arith.subf %107, %137 : vector<8x128xf32>
    %139 = arith.mulf %130, %138 : vector<8x128xf32>
    %140 = arith.addf %137, %139 : vector<8x128xf32>
    %c3_44 = arith.constant 3 : index
    %c0_45 = arith.constant 0 : index
    %c0_46 = arith.constant 0 : index
    %141 = vector.load %arg10[%c3_44, %c0_45, %c0_46] : memref<8x8x128xf32, #tpu.memory_space<vmem>>, vector<1x8x128xf32>
    %142 = vector.shape_cast %141 : vector<1x8x128xf32> to vector<8x128xf32>
    %143 = vector.shape_cast %140 : vector<8x128xf32> to vector<1x8x128xf32>
    tpu.vector_store %arg10[%c3_44, %c0_45, %c0_46], %143 {strides = array<i32>} : memref<8x8x128xf32, #tpu.memory_space<vmem>>, vector<1x8x128xf32>,
    %c4 = arith.constant 4 : index
    %c0_47 = arith.constant 0 : index
    %c0_48 = arith.constant 0 : index
    %144 = vector.load %arg9[%c4, %c0_47, %c0_48] : memref<8x8x384xf32, #tpu.memory_space<vmem>>, vector<1x8x384xf32>
    %145 = vector.shape_cast %144 : vector<1x8x384xf32> to vector<8x384xf32>
    %146 = arith.truncf %140 : vector<8x128xf32> to vector<8x128xbf16>
    %cst_49 = arith.constant dense<0.000000e+00> : vector<8x384xf32>
    %147 = tpu.matmul %146, %9, %cst_49 {dimension_numbers = #tpu.dot_dimension_numbers<[1], [0], [0], [1], [0, 0, 1, 1], [], []>} : vector<8x128xbf16>, vector<128x384xbf16>, vector<8x384xf32> -> vector<8x384xf32>
    %148 = vector.extract_strided_slice %145 {offsets = [0, 0], sizes = [8, 128], strides = [1, 1]} : vector<8x384xf32> to vector<8x128xf32>
    %149 = vector.extract_strided_slice %147 {offsets = [0, 0], sizes = [8, 128], strides = [1, 1]} : vector<8x384xf32> to vector<8x128xf32>
    %150 = arith.addf %148, %149 : vector<8x128xf32>
    %151 = arith.negf %150 : vector<8x128xf32>
    %152 = math.exp %151 : vector<8x128xf32>
    %cst_50 = arith.constant 1.000000e+00 : f32
    %153 = vector.broadcast %cst_50 : f32 to vector<8x128xf32>
    %154 = arith.addf %153, %152 : vector<8x128xf32>
    %155 = arith.divf %153, %154 : vector<8x128xf32>
    %156 = vector.extract_strided_slice %145 {offsets = [0, 128], sizes = [8, 128], strides = [1, 1]} : vector<8x384xf32> to vector<8x128xf32>
    %157 = vector.extract_strided_slice %147 {offsets = [0, 128], sizes = [8, 128], strides = [1, 1]} : vector<8x384xf32> to vector<8x128xf32>
    %158 = arith.addf %156, %157 : vector<8x128xf32>
    %159 = arith.negf %158 : vector<8x128xf32>
    %160 = math.exp %159 : vector<8x128xf32>
    %cst_51 = arith.constant 1.000000e+00 : f32
    %161 = vector.broadcast %cst_51 : f32 to vector<8x128xf32>
    %162 = arith.addf %161, %160 : vector<8x128xf32>
    %163 = arith.divf %161, %162 : vector<8x128xf32>
    %164 = vector.extract_strided_slice %145 {offsets = [0, 256], sizes = [8, 128], strides = [1, 1]} : vector<8x384xf32> to vector<8x128xf32>
    %165 = vector.extract_strided_slice %147 {offsets = [0, 256], sizes = [8, 128], strides = [1, 1]} : vector<8x384xf32> to vector<8x128xf32>
    %166 = vector.broadcast %10 : vector<1x128xf32> to vector<8x128xf32>
    %167 = arith.addf %165, %166 : vector<8x128xf32>
    %168 = arith.mulf %155, %167 : vector<8x128xf32>
    %169 = arith.addf %164, %168 : vector<8x128xf32>
    %170 = math.tanh %169 : vector<8x128xf32>
    %171 = arith.subf %140, %170 : vector<8x128xf32>
    %172 = arith.mulf %163, %171 : vector<8x128xf32>
    %173 = arith.addf %170, %172 : vector<8x128xf32>
    %c4_52 = arith.constant 4 : index
    %c0_53 = arith.constant 0 : index
    %c0_54 = arith.constant 0 : index
    %174 = vector.load %arg10[%c4_52, %c0_53, %c0_54] : memref<8x8x128xf32, #tpu.memory_space<vmem>>, vector<1x8x128xf32>
    %175 = vector.shape_cast %174 : vector<1x8x128xf32> to vector<8x128xf32>
    %176 = vector.shape_cast %173 : vector<8x128xf32> to vector<1x8x128xf32>
    tpu.vector_store %arg10[%c4_52, %c0_53, %c0_54], %176 {strides = array<i32>} : memref<8x8x128xf32, #tpu.memory_space<vmem>>, vector<1x8x128xf32>,
    %c5 = arith.constant 5 : index
    %c0_55 = arith.constant 0 : index
    %c0_56 = arith.constant 0 : index
    %177 = vector.load %arg9[%c5, %c0_55, %c0_56] : memref<8x8x384xf32, #tpu.memory_space<vmem>>, vector<1x8x384xf32>
    %178 = vector.shape_cast %177 : vector<1x8x384xf32> to vector<8x384xf32>
    %179 = arith.truncf %173 : vector<8x128xf32> to vector<8x128xbf16>
    %cst_57 = arith.constant dense<0.000000e+00> : vector<8x384xf32>
    %180 = tpu.matmul %179, %9, %cst_57 {dimension_numbers = #tpu.dot_dimension_numbers<[1], [0], [0], [1], [0, 0, 1, 1], [], []>} : vector<8x128xbf16>, vector<128x384xbf16>, vector<8x384xf32> -> vector<8x384xf32>
    %181 = vector.extract_strided_slice %178 {offsets = [0, 0], sizes = [8, 128], strides = [1, 1]} : vector<8x384xf32> to vector<8x128xf32>
    %182 = vector.extract_strided_slice %180 {offsets = [0, 0], sizes = [8, 128], strides = [1, 1]} : vector<8x384xf32> to vector<8x128xf32>
    %183 = arith.addf %181, %182 : vector<8x128xf32>
    %184 = arith.negf %183 : vector<8x128xf32>
    %185 = math.exp %184 : vector<8x128xf32>
    %cst_58 = arith.constant 1.000000e+00 : f32
    %186 = vector.broadcast %cst_58 : f32 to vector<8x128xf32>
    %187 = arith.addf %186, %185 : vector<8x128xf32>
    %188 = arith.divf %186, %187 : vector<8x128xf32>
    %189 = vector.extract_strided_slice %178 {offsets = [0, 128], sizes = [8, 128], strides = [1, 1]} : vector<8x384xf32> to vector<8x128xf32>
    %190 = vector.extract_strided_slice %180 {offsets = [0, 128], sizes = [8, 128], strides = [1, 1]} : vector<8x384xf32> to vector<8x128xf32>
    %191 = arith.addf %189, %190 : vector<8x128xf32>
    %192 = arith.negf %191 : vector<8x128xf32>
    %193 = math.exp %192 : vector<8x128xf32>
    %cst_59 = arith.constant 1.000000e+00 : f32
    %194 = vector.broadcast %cst_59 : f32 to vector<8x128xf32>
    %195 = arith.addf %194, %193 : vector<8x128xf32>
    %196 = arith.divf %194, %195 : vector<8x128xf32>
    %197 = vector.extract_strided_slice %178 {offsets = [0, 256], sizes = [8, 128], strides = [1, 1]} : vector<8x384xf32> to vector<8x128xf32>
    %198 = vector.extract_strided_slice %180 {offsets = [0, 256], sizes = [8, 128], strides = [1, 1]} : vector<8x384xf32> to vector<8x128xf32>
    %199 = vector.broadcast %10 : vector<1x128xf32> to vector<8x128xf32>
    %200 = arith.addf %198, %199 : vector<8x128xf32>
    %201 = arith.mulf %188, %200 : vector<8x128xf32>
    %202 = arith.addf %197, %201 : vector<8x128xf32>
    %203 = math.tanh %202 : vector<8x128xf32>
    %204 = arith.subf %173, %203 : vector<8x128xf32>
    %205 = arith.mulf %196, %204 : vector<8x128xf32>
    %206 = arith.addf %203, %205 : vector<8x128xf32>
    %c5_60 = arith.constant 5 : index
    %c0_61 = arith.constant 0 : index
    %c0_62 = arith.constant 0 : index
    %207 = vector.load %arg10[%c5_60, %c0_61, %c0_62] : memref<8x8x128xf32, #tpu.memory_space<vmem>>, vector<1x8x128xf32>
    %208 = vector.shape_cast %207 : vector<1x8x128xf32> to vector<8x128xf32>
    %209 = vector.shape_cast %206 : vector<8x128xf32> to vector<1x8x128xf32>
    tpu.vector_store %arg10[%c5_60, %c0_61, %c0_62], %209 {strides = array<i32>} : memref<8x8x128xf32, #tpu.memory_space<vmem>>, vector<1x8x128xf32>,
    %c6 = arith.constant 6 : index
    %c0_63 = arith.constant 0 : index
    %c0_64 = arith.constant 0 : index
    %210 = vector.load %arg9[%c6, %c0_63, %c0_64] : memref<8x8x384xf32, #tpu.memory_space<vmem>>, vector<1x8x384xf32>
    %211 = vector.shape_cast %210 : vector<1x8x384xf32> to vector<8x384xf32>
    %212 = arith.truncf %206 : vector<8x128xf32> to vector<8x128xbf16>
    %cst_65 = arith.constant dense<0.000000e+00> : vector<8x384xf32>
    %213 = tpu.matmul %212, %9, %cst_65 {dimension_numbers = #tpu.dot_dimension_numbers<[1], [0], [0], [1], [0, 0, 1, 1], [], []>} : vector<8x128xbf16>, vector<128x384xbf16>, vector<8x384xf32> -> vector<8x384xf32>
    %214 = vector.extract_strided_slice %211 {offsets = [0, 0], sizes = [8, 128], strides = [1, 1]} : vector<8x384xf32> to vector<8x128xf32>
    %215 = vector.extract_strided_slice %213 {offsets = [0, 0], sizes = [8, 128], strides = [1, 1]} : vector<8x384xf32> to vector<8x128xf32>
    %216 = arith.addf %214, %215 : vector<8x128xf32>
    %217 = arith.negf %216 : vector<8x128xf32>
    %218 = math.exp %217 : vector<8x128xf32>
    %cst_66 = arith.constant 1.000000e+00 : f32
    %219 = vector.broadcast %cst_66 : f32 to vector<8x128xf32>
    %220 = arith.addf %219, %218 : vector<8x128xf32>
    %221 = arith.divf %219, %220 : vector<8x128xf32>
    %222 = vector.extract_strided_slice %211 {offsets = [0, 128], sizes = [8, 128], strides = [1, 1]} : vector<8x384xf32> to vector<8x128xf32>
    %223 = vector.extract_strided_slice %213 {offsets = [0, 128], sizes = [8, 128], strides = [1, 1]} : vector<8x384xf32> to vector<8x128xf32>
    %224 = arith.addf %222, %223 : vector<8x128xf32>
    %225 = arith.negf %224 : vector<8x128xf32>
    %226 = math.exp %225 : vector<8x128xf32>
    %cst_67 = arith.constant 1.000000e+00 : f32
    %227 = vector.broadcast %cst_67 : f32 to vector<8x128xf32>
    %228 = arith.addf %227, %226 : vector<8x128xf32>
    %229 = arith.divf %227, %228 : vector<8x128xf32>
    %230 = vector.extract_strided_slice %211 {offsets = [0, 256], sizes = [8, 128], strides = [1, 1]} : vector<8x384xf32> to vector<8x128xf32>
    %231 = vector.extract_strided_slice %213 {offsets = [0, 256], sizes = [8, 128], strides = [1, 1]} : vector<8x384xf32> to vector<8x128xf32>
    %232 = vector.broadcast %10 : vector<1x128xf32> to vector<8x128xf32>
    %233 = arith.addf %231, %232 : vector<8x128xf32>
    %234 = arith.mulf %221, %233 : vector<8x128xf32>
    %235 = arith.addf %230, %234 : vector<8x128xf32>
    %236 = math.tanh %235 : vector<8x128xf32>
    %237 = arith.subf %206, %236 : vector<8x128xf32>
    %238 = arith.mulf %229, %237 : vector<8x128xf32>
    %239 = arith.addf %236, %238 : vector<8x128xf32>
    %c6_68 = arith.constant 6 : index
    %c0_69 = arith.constant 0 : index
    %c0_70 = arith.constant 0 : index
    %240 = vector.load %arg10[%c6_68, %c0_69, %c0_70] : memref<8x8x128xf32, #tpu.memory_space<vmem>>, vector<1x8x128xf32>
    %241 = vector.shape_cast %240 : vector<1x8x128xf32> to vector<8x128xf32>
    %242 = vector.shape_cast %239 : vector<8x128xf32> to vector<1x8x128xf32>
    tpu.vector_store %arg10[%c6_68, %c0_69, %c0_70], %242 {strides = array<i32>} : memref<8x8x128xf32, #tpu.memory_space<vmem>>, vector<1x8x128xf32>,
    %c7 = arith.constant 7 : index
    %c0_71 = arith.constant 0 : index
    %c0_72 = arith.constant 0 : index
    %243 = vector.load %arg9[%c7, %c0_71, %c0_72] : memref<8x8x384xf32, #tpu.memory_space<vmem>>, vector<1x8x384xf32>
    %244 = vector.shape_cast %243 : vector<1x8x384xf32> to vector<8x384xf32>
    %245 = arith.truncf %239 : vector<8x128xf32> to vector<8x128xbf16>
    %cst_73 = arith.constant dense<0.000000e+00> : vector<8x384xf32>
    %246 = tpu.matmul %245, %9, %cst_73 {dimension_numbers = #tpu.dot_dimension_numbers<[1], [0], [0], [1], [0, 0, 1, 1], [], []>} : vector<8x128xbf16>, vector<128x384xbf16>, vector<8x384xf32> -> vector<8x384xf32>
    %247 = vector.extract_strided_slice %244 {offsets = [0, 0], sizes = [8, 128], strides = [1, 1]} : vector<8x384xf32> to vector<8x128xf32>
    %248 = vector.extract_strided_slice %246 {offsets = [0, 0], sizes = [8, 128], strides = [1, 1]} : vector<8x384xf32> to vector<8x128xf32>
    %249 = arith.addf %247, %248 : vector<8x128xf32>
    %250 = arith.negf %249 : vector<8x128xf32>
    %251 = math.exp %250 : vector<8x128xf32>
    %cst_74 = arith.constant 1.000000e+00 : f32
    %252 = vector.broadcast %cst_74 : f32 to vector<8x128xf32>
    %253 = arith.addf %252, %251 : vector<8x128xf32>
    %254 = arith.divf %252, %253 : vector<8x128xf32>
    %255 = vector.extract_strided_slice %244 {offsets = [0, 128], sizes = [8, 128], strides = [1, 1]} : vector<8x384xf32> to vector<8x128xf32>
    %256 = vector.extract_strided_slice %246 {offsets = [0, 128], sizes = [8, 128], strides = [1, 1]} : vector<8x384xf32> to vector<8x128xf32>
    %257 = arith.addf %255, %256 : vector<8x128xf32>
    %258 = arith.negf %257 : vector<8x128xf32>
    %259 = math.exp %258 : vector<8x128xf32>
    %cst_75 = arith.constant 1.000000e+00 : f32
    %260 = vector.broadcast %cst_75 : f32 to vector<8x128xf32>
    %261 = arith.addf %260, %259 : vector<8x128xf32>
    %262 = arith.divf %260, %261 : vector<8x128xf32>
    %263 = vector.extract_strided_slice %244 {offsets = [0, 256], sizes = [8, 128], strides = [1, 1]} : vector<8x384xf32> to vector<8x128xf32>
    %264 = vector.extract_strided_slice %246 {offsets = [0, 256], sizes = [8, 128], strides = [1, 1]} : vector<8x384xf32> to vector<8x128xf32>
    %265 = vector.broadcast %10 : vector<1x128xf32> to vector<8x128xf32>
    %266 = arith.addf %264, %265 : vector<8x128xf32>
    %267 = arith.mulf %254, %266 : vector<8x128xf32>
    %268 = arith.addf %263, %267 : vector<8x128xf32>
    %269 = math.tanh %268 : vector<8x128xf32>
    %270 = arith.subf %239, %269 : vector<8x128xf32>
    %271 = arith.mulf %262, %270 : vector<8x128xf32>
    %272 = arith.addf %269, %271 : vector<8x128xf32>
    %c7_76 = arith.constant 7 : index
    %c0_77 = arith.constant 0 : index
    %c0_78 = arith.constant 0 : index
    %273 = vector.load %arg10[%c7_76, %c0_77, %c0_78] : memref<8x8x128xf32, #tpu.memory_space<vmem>>, vector<1x8x128xf32>
    %274 = vector.shape_cast %273 : vector<1x8x128xf32> to vector<8x128xf32>
    %275 = vector.shape_cast %272 : vector<8x128xf32> to vector<1x8x128xf32>
    tpu.vector_store %arg10[%c7_76, %c0_77, %c0_78], %275 {strides = array<i32>} : memref<8x8x128xf32, #tpu.memory_space<vmem>>, vector<1x8x128xf32>,
    %c0_79 = arith.constant 0 : index
    %c0_80 = arith.constant 0 : index
    %c0_81 = arith.constant 0 : index
    %276 = vector.load %arg10[%c0_79, %c0_80, %c0_81] : memref<8x8x128xf32, #tpu.memory_space<vmem>>, vector<8x8x128xf32>
    %c0_82 = arith.constant 0 : index
    %c0_83 = arith.constant 0 : index
    %277 = vector.load %arg6[%c0_82, %c0_83] : memref<1x128xf32, #tpu.memory_space<vmem>>, vector<1x128xf32>
    %278 = vector.shape_cast %277 : vector<1x128xf32> to vector<1x1x128xf32>
    %279 = vector.broadcast %278 : vector<1x1x128xf32> to vector<8x8x128xf32>
    %280 = arith.mulf %276, %279 : vector<8x8x128xf32>
    %cst_84 = arith.constant dense<0.000000e+00> : vector<8x8xf32>
    %281 = vector.multi_reduction <add>, %280, %cst_84 [2] : vector<8x8x128xf32> to vector<8x8xf32>
    %282 = vector.shape_cast %281 : vector<8x8xf32> to vector<8x8x1xf32>
    %c0_85 = arith.constant 0 : index
    %c0_86 = arith.constant 0 : index
    %283 = vector.load %arg7[%c0_85, %c0_86] : memref<1x1xf32, #tpu.memory_space<vmem>>, vector<1x1xf32>
    %284 = vector.extract %283[0, 0] : f32 from vector<1x1xf32>
    %285 = vector.broadcast %284 : f32 to vector<8x8x1xf32>
    %286 = arith.addf %282, %285 : vector<8x8x1xf32>
    %cst_87 = arith.constant dense<0xFF800000> : vector<8x1xf32>
    %287 = vector.multi_reduction <maximumf>, %286, %cst_87 [0] : vector<8x8x1xf32> to vector<8x1xf32>
    %288 = vector.shape_cast %287 : vector<8x1xf32> to vector<1x8x1xf32>
    %289 = vector.broadcast %288 : vector<1x8x1xf32> to vector<8x8x1xf32>
    %290 = arith.subf %286, %289 : vector<8x8x1xf32>
    %291 = math.exp %290 : vector<8x8x1xf32>
    %cst_88 = arith.constant dense<0.000000e+00> : vector<8x1xf32>
    %292 = vector.multi_reduction <add>, %291, %cst_88 [0] : vector<8x8x1xf32> to vector<8x1xf32>
    %293 = vector.shape_cast %292 : vector<8x1xf32> to vector<1x8x1xf32>
    %294 = tpu.reciprocal %293 {approx = true} : vector<1x8x1xf32> -> vector<1x8x1xf32>
    %295 = vector.broadcast %294 : vector<1x8x1xf32> to vector<8x8x1xf32>
    %296 = arith.mulf %291, %295 : vector<8x8x1xf32>
    %297 = vector.broadcast %296 : vector<8x8x1xf32> to vector<8x8x128xf32>
    %298 = arith.mulf %276, %297 : vector<8x8x128xf32>
    %cst_89 = arith.constant dense<0.000000e+00> : vector<8x128xf32>
    %299 = vector.multi_reduction <add>, %298, %cst_89 [0] : vector<8x8x128xf32> to vector<8x128xf32>
    %300 = arith.truncf %299 : vector<8x128xf32> to vector<8x128xbf16>
    %c0_90 = arith.constant 0 : index
    %c0_91 = arith.constant 0 : index
    %301 = vector.load %arg8[%c0_90, %c0_91] : memref<8x128xbf16, #tpu.memory_space<vmem>>, vector<8x128xbf16>
    tpu.vector_store %arg8[%c0_90, %c0_91], %300 {strides = array<i32>} : memref<8x128xbf16, #tpu.memory_space<vmem>>, vector<8x128xbf16>,
    return
  }
  func.func @transform_0(%arg0: i32) -> (i32, i32, i32) {
    %c0_i32 = arith.constant 0 : i32
    %c0_i32_0 = arith.constant 0 : i32
    %c0_i32_1 = arith.constant 0 : i32
    return %c0_i32, %arg0, %c0_i32_0 : i32, i32, i32
  }
  func.func @transform_1(%arg0: i32) -> (i32, i32) {
    %c0_i32 = arith.constant 0 : i32
    %c0_i32_0 = arith.constant 0 : i32
    %c0_i32_1 = arith.constant 0 : i32
    return %c0_i32, %c0_i32_0 : i32, i32
  }
  func.func @transform_2(%arg0: i32) -> (i32, i32) {
    %c0_i32 = arith.constant 0 : i32
    %c0_i32_0 = arith.constant 0 : i32
    %c0_i32_1 = arith.constant 0 : i32
    return %c0_i32, %c0_i32_0 : i32, i32
  }
  func.func @transform_3(%arg0: i32) -> (i32, i32) {
    %c0_i32 = arith.constant 0 : i32
    %c0_i32_0 = arith.constant 0 : i32
    %c0_i32_1 = arith.constant 0 : i32
    return %c0_i32, %c0_i32_0 : i32, i32
  }
  func.func @transform_4(%arg0: i32) -> (i32, i32) {
    %c0_i32 = arith.constant 0 : i32
    %c0_i32_0 = arith.constant 0 : i32
    %c0_i32_1 = arith.constant 0 : i32
    return %c0_i32, %c0_i32_0 : i32, i32
  }
  func.func @transform_5(%arg0: i32) -> (i32, i32) {
    %c0_i32 = arith.constant 0 : i32
    %c0_i32_0 = arith.constant 0 : i32
    %c0_i32_1 = arith.constant 0 : i32
    return %c0_i32, %c0_i32_0 : i32, i32
  }
  func.func @transform_6(%arg0: i32) -> (i32, i32) {
    %c0_i32 = arith.constant 0 : i32
    %c0_i32_0 = arith.constant 0 : i32
    %c0_i32_1 = arith.constant 0 : i32
    return %c0_i32, %c0_i32_0 : i32, i32
  }
  func.func @transform_7(%arg0: i32) -> (i32, i32) {
    %c0_i32 = arith.constant 0 : i32
    %c0_i32_0 = arith.constant 0 : i32
    return %arg0, %c0_i32 : i32, i32
  }
}

module attributes {stable_mosaic.version = 11 : i64} {
  func.func @_output_proj_kernel(%arg0: i32, %arg1: i32, %arg2: memref<8x128xbf16, #tpu.memory_space<vmem>>, %arg3: memref<128x1024xbf16, #tpu.memory_space<vmem>>, %arg4: memref<1x1024xf32, #tpu.memory_space<vmem>>, %arg5: memref<8x1024xf32, #tpu.memory_space<vmem>>) attributes {dimension_semantics = [#tpu.dimension_semantics<parallel>, #tpu.dimension_semantics<parallel>], iteration_bounds = array<i64: 1, 1>, scalar_prefetch = 0 : i64, scratch_operands = 0 : i64, tpu.core_type = #tpu.core_type<tc>, window_params = [{transform_indices = @transform_0, window_bounds = array<i64: 8, 128>}, {transform_indices = @transform_1, window_bounds = array<i64: 128, 1024>}, {transform_indices = @transform_2, window_bounds = array<i64: 1, 1024>}, {transform_indices = @transform_3, window_bounds = array<i64: 8, 1024>}]} {
    %c0 = arith.constant 0 : index
    %c0_0 = arith.constant 0 : index
    %0 = vector.load %arg2[%c0, %c0_0] : memref<8x128xbf16, #tpu.memory_space<vmem>>, vector<8x128xbf16>
    %c0_1 = arith.constant 0 : index
    %c0_2 = arith.constant 0 : index
    %1 = vector.load %arg3[%c0_1, %c0_2] : memref<128x1024xbf16, #tpu.memory_space<vmem>>, vector<128x1024xbf16>
    %cst = arith.constant dense<0.000000e+00> : vector<8x1024xf32>
    %2 = tpu.matmul %0, %1, %cst {dimension_numbers = #tpu.dot_dimension_numbers<[1], [0], [0], [1], [0, 0, 1, 1], [], []>} : vector<8x128xbf16>, vector<128x1024xbf16>, vector<8x1024xf32> -> vector<8x1024xf32>
    %c0_3 = arith.constant 0 : index
    %c0_4 = arith.constant 0 : index
    %3 = vector.load %arg4[%c0_3, %c0_4] : memref<1x1024xf32, #tpu.memory_space<vmem>>, vector<1x1024xf32>
    %4 = vector.broadcast %3 : vector<1x1024xf32> to vector<8x1024xf32>
    %5 = arith.addf %2, %4 : vector<8x1024xf32>
    %c0_5 = arith.constant 0 : index
    %c0_6 = arith.constant 0 : index
    %6 = vector.load %arg5[%c0_5, %c0_6] : memref<8x1024xf32, #tpu.memory_space<vmem>>, vector<8x1024xf32>
    tpu.vector_store %arg5[%c0_5, %c0_6], %5 {strides = array<i32>} : memref<8x1024xf32, #tpu.memory_space<vmem>>, vector<8x1024xf32>,
    return
  }
  func.func @transform_0(%arg0: i32, %arg1: i32) -> (i32, i32) {
    %c0_i32 = arith.constant 0 : i32
    %c0_i32_0 = arith.constant 0 : i32
    return %arg1, %c0_i32 : i32, i32
  }
  func.func @transform_1(%arg0: i32, %arg1: i32) -> (i32, i32) {
    %c0_i32 = arith.constant 0 : i32
    %c0_i32_0 = arith.constant 0 : i32
    return %c0_i32, %arg0 : i32, i32
  }
  func.func @transform_2(%arg0: i32, %arg1: i32) -> (i32, i32) {
    %c0_i32 = arith.constant 0 : i32
    %c0_i32_0 = arith.constant 0 : i32
    return %c0_i32, %arg0 : i32, i32
  }
  func.func @transform_3(%arg0: i32, %arg1: i32) -> (i32, i32) {
    %c0_i32 = arith.constant 0 : i32
    return %arg1, %arg0 : i32, i32
  }
}

</mosaic_0001>

<llo_original>
// kernel: session_recommender_forward.3
$region0: #{session_recommender_forward.3}
  #allocation0 [shape = 'u32[]', space=smem, size = 0x4, offset = 0x4, fixed_abs, tag = 'smem constant byte address 0x4 - core index']
  #allocation1 [shape = 'u32[72,128]{1,0:T(1,128)}', space=vmem, size = 0x9000, scoped, tag = 'internal scratch']
  %s0 = inlined_call_operand.vmem [shape: bf16[8,128], index: 0, kind: input, shape index: {}]
  %s1 = inlined_call_operand.vmem [shape: bf16[128,1024], index: 1, kind: input, shape index: {}]
  %s2 = inlined_call_operand.vmem [shape: f32[1,1024], index: 2, kind: input, shape index: {}]
  %s3 = inlined_call_operand.hbm [shape: f32[8,1024], index: 3, kind: output, shape index: {}]
  %s4 = sld [smem:[#allocation0]]
  $region22: #{session_recommender_forward.3} parent=0
    _
  %s6 = ssub.s32 1, %s4
  %s7 = scalar_select 0, %s6, %s4
  $region1: #{session_recommender_forward.3} parent=0
    #allocation2 [shape = 'u8[32768]{0}', space=vmem, size = 0x8000, scoped, tag = 'output window, operand 0, single buffered']
    #allocation3 [shape = 's32[1]{0}', space=sflag, size = 0x4, scoped, tag = 'scoped memory for session_recommender_forward.3']
    %8 = vsyncpa [#allocation3], 0
    // Predicated region
    $region2: #{session_recommender_forward.3} parent=1 // pred_check
      _
    $region3: #{session_recommender_forward.3} parent=1 // pred_check_branch
      %10 = sbr.rel (0) target = $region5
    $region4: #{session_recommender_forward.3} parent=1 // pred_region
      _
    $region5: #{session_recommender_forward.3} parent=1 // pred_fallthru
      _
    // Predicated region
    $region6: #{session_recommender_forward.3} parent=1 // pred_check
      _
    $region7: #{session_recommender_forward.3} parent=1 // pred_check_branch
      %12 = sbr.rel (0) target = $region9
    $region8: #{session_recommender_forward.3} parent=1 // pred_region
      _
    $region9: #{session_recommender_forward.3} parent=1 // pred_fallthru
      _
    // Predicated region
    $region10: #{session_recommender_forward.3} parent=1 // pred_check
      _
    $region11: #{session_recommender_forward.3} parent=1 // pred_check_branch
      %14 = sbr.rel (0) target = $region13
    $region12: #{session_recommender_forward.3} parent=1 // pred_region
      _
    $region13: #{session_recommender_forward.3} parent=1 // pred_fallthru
      _
    %v15 = vld [vmem:[%s0] sm:$0xf]
    %v16 = vld [vmem:[%s1] sm:$0xff]
    %v17 = vld [vmem:[%s1 + $0x8] sm:$0xff]
    %v18 = vld [vmem:[%s1 + $0x10] sm:$0xff]
    %v19 = vld [vmem:[%s1 + $0x18] sm:$0xff]
    %v20 = vld [vmem:[%s1 + $0x20] sm:$0xff]
    %v21 = vld [vmem:[%s1 + $0x28] sm:$0xff]
    %v22 = vld [vmem:[%s1 + $0x30] sm:$0xff]
    %v23 = vld [vmem:[%s1 + $0x38] sm:$0xff]
    %v24 = vld [vmem:[%s1 + $0x40] sm:$0xff]
    %v25 = vld [vmem:[%s1 + $0x48] sm:$0xff]
    %v26 = vld [vmem:[%s1 + $0x50] sm:$0xff]
    %v27 = vld [vmem:[%s1 + $0x58] sm:$0xff]
    %v28 = vld [vmem:[%s1 + $0x60] sm:$0xff]
    %v29 = vld [vmem:[%s1 + $0x68] sm:$0xff]
    %v30 = vld [vmem:[%s1 + $0x70] sm:$0xff]
    %v31 = vld [vmem:[%s1 + $0x78] sm:$0xff]
    %v32 = vld [vmem:[%s1 + $0x80] sm:$0xff]
    %v33 = vld [vmem:[%s1 + $0x88] sm:$0xff]
    %v34 = vld [vmem:[%s1 + $0x90] sm:$0xff]
    %v35 = vld [vmem:[%s1 + $0x98] sm:$0xff]
    %v36 = vld [vmem:[%s1 + $0xa0] sm:$0xff]
    %v37 = vld [vmem:[%s1 + $0xa8] sm:$0xff]
    %v38 = vld [vmem:[%s1 + $0xb0] sm:$0xff]
    %v39 = vld [vmem:[%s1 + $0xb8] sm:$0xff]
    %v40 = vld [vmem:[%s1 + $0xc0] sm:$0xff]
    %v41 = vld [vmem:[%s1 + $0xc8] sm:$0xff]
    %v42 = vld [vmem:[%s1 + $0xd0] sm:$0xff]
    %v43 = vld [vmem:[%s1 + $0xd8] sm:$0xff]
    %v44 = vld [vmem:[%s1 + $0xe0] sm:$0xff]
    %v45 = vld [vmem:[%s1 + $0xe8] sm:$0xff]
    %v46 = vld [vmem:[%s1 + $0xf0] sm:$0xff]
    %v47 = vld [vmem:[%s1 + $0xf8] sm:$0xff]
    %v48 = vld [vmem:[%s1 + $0x100] sm:$0xff]
    %v49 = vld [vmem:[%s1 + $0x108] sm:$0xff]
    %v50 = vld [vmem:[%s1 + $0x110] sm:$0xff]
    %v51 = vld [vmem:[%s1 + $0x118] sm:$0xff]
    %v52 = vld [vmem:[%s1 + $0x120] sm:$0xff]
    %v53 = vld [vmem:[%s1 + $0x128] sm:$0xff]
    %v54 = vld [vmem:[%s1 + $0x130] sm:$0xff]
    %v55 = vld [vmem:[%s1 + $0x138] sm:$0xff]
    %v56 = vld [vmem:[%s1 + $0x140] sm:$0xff]
    %v57 = vld [vmem:[%s1 + $0x148] sm:$0xff]
    %v58 = vld [vmem:[%s1 + $0x150] sm:$0xff]
    %v59 = vld [vmem:[%s1 + $0x158] sm:$0xff]
    %v60 = vld [vmem:[%s1 + $0x160] sm:$0xff]
    %v61 = vld [vmem:[%s1 + $0x168] sm:$0xff]
    %v62 = vld [vmem:[%s1 + $0x170] sm:$0xff]
    %v63 = vld [vmem:[%s1 + $0x178] sm:$0xff]
    %v64 = vld [vmem:[%s1 + $0x180] sm:$0xff]
    %v65 = vld [vmem:[%s1 + $0x188] sm:$0xff]
    %v66 = vld [vmem:[%s1 + $0x190] sm:$0xff]
    %v67 = vld [vmem:[%s1 + $0x198] sm:$0xff]
    %v68 = vld [vmem:[%s1 + $0x1a0] sm:$0xff]
    %v69 = vld [vmem:[%s1 + $0x1a8] sm:$0xff]
    %v70 = vld [vmem:[%s1 + $0x1b0] sm:$0xff]
    %v71 = vld [vmem:[%s1 + $0x1b8] sm:$0xff]
    %v72 = vld [vmem:[%s1 + $0x1c0] sm:$0xff]
    %v73 = vld [vmem:[%s1 + $0x1c8] sm:$0xff]
    %v74 = vld [vmem:[%s1 + $0x1d0] sm:$0xff]
    %v75 = vld [vmem:[%s1 + $0x1d8] sm:$0xff]
    %v76 = vld [vmem:[%s1 + $0x1e0] sm:$0xff]
    %v77 = vld [vmem:[%s1 + $0x1e8] sm:$0xff]
    %v78 = vld [vmem:[%s1 + $0x1f0] sm:$0xff]
    %v79 = vld [vmem:[%s1 + $0x1f8] sm:$0xff]
    %v80 = vld [vmem:[%s2] sm:$0xff]
    %v82 = vperm.slane %v80, 0
    %v83 = vperm.slane %v80, 1
    %v84 = vperm.slane %v80, 2
    %v85 = vperm.slane %v80, 3
    %v86 = vperm.slane %v80, 4
    %v87 = vperm.slane %v80, 5
    %v88 = vperm.slane %v80, 6
    %v89 = vperm.slane %v80, 7
    %v162 = vunpack.c.l.b16 %v16
    %v163 = vunpack.c.h.b16 %v16
    %v164 = vunpack.c.l.b16 %v17
    %v165 = vunpack.c.h.b16 %v17
    %v166 = vunpack.c.l.b16 %v18
    %v167 = vunpack.c.h.b16 %v18
    %v168 = vunpack.c.l.b16 %v19
    %v169 = vunpack.c.h.b16 %v19
    %v170 = vunpack.c.l.b16 %v20
    %v171 = vunpack.c.h.b16 %v20
    %v172 = vunpack.c.l.b16 %v21
    %v173 = vunpack.c.h.b16 %v21
    %v174 = vunpack.c.l.b16 %v22
    %v175 = vunpack.c.h.b16 %v22
    %v176 = vunpack.c.l.b16 %v23
    %v177 = vunpack.c.h.b16 %v23
    %v178 = vunpack.c.l.b16 %v24
    %v179 = vunpack.c.h.b16 %v24
    %v180 = vunpack.c.l.b16 %v25
    %v181 = vunpack.c.h.b16 %v25
    %v182 = vunpack.c.l.b16 %v26
    %v183 = vunpack.c.h.b16 %v26
    %v184 = vunpack.c.l.b16 %v27
    %v185 = vunpack.c.h.b16 %v27
    %v186 = vunpack.c.l.b16 %v28
    %v187 = vunpack.c.h.b16 %v28
    %v188 = vunpack.c.l.b16 %v29
    %v189 = vunpack.c.h.b16 %v29
    %v190 = vunpack.c.l.b16 %v30
    %v191 = vunpack.c.h.b16 %v30
    %v192 = vunpack.c.l.b16 %v31
    %v193 = vunpack.c.h.b16 %v31
    %v194 = vunpack.c.l.b16 %v32
    %v195 = vunpack.c.h.b16 %v32
    %v196 = vunpack.c.l.b16 %v33
    %v197 = vunpack.c.h.b16 %v33
    %v198 = vunpack.c.l.b16 %v34
    %v199 = vunpack.c.h.b16 %v34
    %v200 = vunpack.c.l.b16 %v35
    %v201 = vunpack.c.h.b16 %v35
    %v202 = vunpack.c.l.b16 %v36
    %v203 = vunpack.c.h.b16 %v36
    %v204 = vunpack.c.l.b16 %v37
    %v205 = vunpack.c.h.b16 %v37
    %v206 = vunpack.c.l.b16 %v38
    %v207 = vunpack.c.h.b16 %v38
    %v208 = vunpack.c.l.b16 %v39
    %v209 = vunpack.c.h.b16 %v39
    %v210 = vunpack.c.l.b16 %v40
    %v211 = vunpack.c.h.b16 %v40
    %v212 = vunpack.c.l.b16 %v41
    %v213 = vunpack.c.h.b16 %v41
    %v214 = vunpack.c.l.b16 %v42
    %v215 = vunpack.c.h.b16 %v42
    %v216 = vunpack.c.l.b16 %v43
    %v217 = vunpack.c.h.b16 %v43
    %v218 = vunpack.c.l.b16 %v44
    %v219 = vunpack.c.h.b16 %v44
    %v220 = vunpack.c.l.b16 %v45
    %v221 = vunpack.c.h.b16 %v45
    %v222 = vunpack.c.l.b16 %v46
    %v223 = vunpack.c.h.b16 %v46
    %v224 = vunpack.c.l.b16 %v47
    %v225 = vunpack.c.h.b16 %v47
    %v226 = vunpack.c.l.b16 %v48
    %v227 = vunpack.c.h.b16 %v48
    %v228 = vunpack.c.l.b16 %v49
    %v229 = vunpack.c.h.b16 %v49
    %v230 = vunpack.c.l.b16 %v50
    %v231 = vunpack.c.h.b16 %v50
    %v232 = vunpack.c.l.b16 %v51
    %v233 = vunpack.c.h.b16 %v51
    %v234 = vunpack.c.l.b16 %v52
    %v235 = vunpack.c.h.b16 %v52
    %v236 = vunpack.c.l.b16 %v53
    %v237 = vunpack.c.h.b16 %v53
    %v238 = vunpack.c.l.b16 %v54
    %v239 = vunpack.c.h.b16 %v54
    %v240 = vunpack.c.l.b16 %v55
    %v241 = vunpack.c.h.b16 %v55
    %v242 = vunpack.c.l.b16 %v56
    %v243 = vunpack.c.h.b16 %v56
    %v244 = vunpack.c.l.b16 %v57
    %v245 = vunpack.c.h.b16 %v57
    %v246 = vunpack.c.l.b16 %v58
    %v247 = vunpack.c.h.b16 %v58
    %v248 = vunpack.c.l.b16 %v59
    %v249 = vunpack.c.h.b16 %v59
    %v250 = vunpack.c.l.b16 %v60
    %v251 = vunpack.c.h.b16 %v60
    %v252 = vunpack.c.l.b16 %v61
    %v253 = vunpack.c.h.b16 %v61
    %v254 = vunpack.c.l.b16 %v62
    %v255 = vunpack.c.h.b16 %v62
    %v256 = vunpack.c.l.b16 %v63
    %v257 = vunpack.c.h.b16 %v63
    %v258 = vunpack.c.l.b16 %v64
    %v259 = vunpack.c.h.b16 %v64
    %v260 = vunpack.c.l.b16 %v65
    %v261 = vunpack.c.h.b16 %v65
    %v262 = vunpack.c.l.b16 %v66
    %v263 = vunpack.c.h.b16 %v66
    %v264 = vunpack.c.l.b16 %v67
    %v265 = vunpack.c.h.b16 %v67
    %v266 = vunpack.c.l.b16 %v68
    %v267 = vunpack.c.h.b16 %v68
    %v268 = vunpack.c.l.b16 %v69
    %v269 = vunpack.c.h.b16 %v69
    %v270 = vunpack.c.l.b16 %v70
    %v271 = vunpack.c.h.b16 %v70
    %v272 = vunpack.c.l.b16 %v71
    %v273 = vunpack.c.h.b16 %v71
    %v274 = vunpack.c.l.b16 %v72
    %v275 = vunpack.c.h.b16 %v72
    %v276 = vunpack.c.l.b16 %v73
    %v277 = vunpack.c.h.b16 %v73
    %v278 = vunpack.c.l.b16 %v74
    %v279 = vunpack.c.h.b16 %v74
    %v280 = vunpack.c.l.b16 %v75
    %v281 = vunpack.c.h.b16 %v75
    %v282 = vunpack.c.l.b16 %v76
    %v283 = vunpack.c.h.b16 %v76
    %v284 = vunpack.c.l.b16 %v77
    %v285 = vunpack.c.h.b16 %v77
    %v286 = vunpack.c.l.b16 %v78
    %v287 = vunpack.c.h.b16 %v78
    %v288 = vunpack.c.l.b16 %v79
    %v289 = vunpack.c.h.b16 %v79
    %v290 = vpack.c.b16 %v170, %v162
    %v291 = vpack.c.b16 %v171, %v163
    %v292 = vpack.c.b16 %v172, %v164
    %v293 = vpack.c.b16 %v173, %v165
    %v294 = vpack.c.b16 %v174, %v166
    %v295 = vpack.c.b16 %v175, %v167
    %v296 = vpack.c.b16 %v176, %v168
    %v297 = vpack.c.b16 %v177, %v169
    %v298 = vpack.c.b16 %v186, %v178
    %v299 = vpack.c.b16 %v187, %v179
    %v300 = vpack.c.b16 %v188, %v180
    %v301 = vpack.c.b16 %v189, %v181
    %v302 = vpack.c.b16 %v190, %v182
    %v303 = vpack.c.b16 %v191, %v183
    %v304 = vpack.c.b16 %v192, %v184
    %v305 = vpack.c.b16 %v193, %v185
    %v306 = vpack.c.b16 %v202, %v194
    %v307 = vpack.c.b16 %v203, %v195
    %v308 = vpack.c.b16 %v204, %v196
    %v309 = vpack.c.b16 %v205, %v197
    %v310 = vpack.c.b16 %v206, %v198
    %v311 = vpack.c.b16 %v207, %v199
    %v312 = vpack.c.b16 %v208, %v200
    %v313 = vpack.c.b16 %v209, %v201
    %v314 = vpack.c.b16 %v218, %v210
    %v315 = vpack.c.b16 %v219, %v211
    %v316 = vpack.c.b16 %v220, %v212
    %v317 = vpack.c.b16 %v221, %v213
    %v318 = vpack.c.b16 %v222, %v214
    %v319 = vpack.c.b16 %v223, %v215
    %v320 = vpack.c.b16 %v224, %v216
    %v321 = vpack.c.b16 %v225, %v217
    %v322 = vpack.c.b16 %v234, %v226
    %v323 = vpack.c.b16 %v235, %v227
    %v324 = vpack.c.b16 %v236, %v228
    %v325 = vpack.c.b16 %v237, %v229
    %v326 = vpack.c.b16 %v238, %v230
    %v327 = vpack.c.b16 %v239, %v231
    %v328 = vpack.c.b16 %v240, %v232
    %v329 = vpack.c.b16 %v241, %v233
    %v330 = vpack.c.b16 %v250, %v242
    %v331 = vpack.c.b16 %v251, %v243
    %v332 = vpack.c.b16 %v252, %v244
    %v333 = vpack.c.b16 %v253, %v245
    %v334 = vpack.c.b16 %v254, %v246
    %v335 = vpack.c.b16 %v255, %v247
    %v336 = vpack.c.b16 %v256, %v248
    %v337 = vpack.c.b16 %v257, %v249
    %v338 = vpack.c.b16 %v266, %v258
    %v339 = vpack.c.b16 %v267, %v259
    %v340 = vpack.c.b16 %v268, %v260
    %v341 = vpack.c.b16 %v269, %v261
    %v342 = vpack.c.b16 %v270, %v262
    %v343 = vpack.c.b16 %v271, %v263
    %v344 = vpack.c.b16 %v272, %v264
    %v345 = vpack.c.b16 %v273, %v265
    %v346 = vpack.c.b16 %v282, %v274
    %v347 = vpack.c.b16 %v283, %v275
    %v348 = vpack.c.b16 %v284, %v276
    %v349 = vpack.c.b16 %v285, %v277
    %v350 = vpack.c.b16 %v286, %v278
    %v351 = vpack.c.b16 %v287, %v279
    %v352 = vpack.c.b16 %v288, %v280
    %v353 = vpack.c.b16 %v289, %v281
    %418 = vmatpush.bf16.msra.mxu0 %v346
    %419 = vmatpush.bf16.msra.mxu0 %v338
    %420 = vmatpush.bf16.msra.mxu0 %v330
    %421 = vmatpush.bf16.msra.mxu0 %v322
    %422 = vmatpush.bf16.msra.mxu0 %v314
    %423 = vmatpush.bf16.msra.mxu0 %v306
    %424 = vmatpush.bf16.msra.mxu0 %v298
    %425 = vmatpush.bf16.msra.mxu0 %v290
    %426 = vmatmul.bf16.gmra.mxu0 %v15
    %v427 = vpop.f32.mrf.mxu0
    %v428 = vadd.f32 %v82, %v427
    %v429 = vpop.f32.mrf.mxu0
    %430 = vdwg.mxu0
    %431 = vmatpush.bf16.msra.mxu0 %v347
    %432 = vmatpush.bf16.msra.mxu0 %v339
    %433 = vmatpush.bf16.msra.mxu0 %v331
    %434 = vmatpush.bf16.msra.mxu0 %v323
    %435 = vmatpush.bf16.msra.mxu0 %v315
    %436 = vmatpush.bf16.msra.mxu0 %v307
    %437 = vmatpush.bf16.msra.mxu0 %v299
    %438 = vmatpush.bf16.msra.mxu0 %v291
    %439 = vmatmul.bf16.gmra.mxu0 %v15
    %v440 = vpop.f32.mrf.mxu0
    %v441 = vadd.f32 %v83, %v440
    %v442 = vpop.f32.mrf.mxu0
    %443 = vdwg.mxu0
    %444 = vmatpush.bf16.msra.mxu0 %v348
    %445 = vmatpush.bf16.msra.mxu0 %v340
    %446 = vmatpush.bf16.msra.mxu0 %v332
    %447 = vmatpush.bf16.msra.mxu0 %v324
    %448 = vmatpush.bf16.msra.mxu0 %v316
    %449 = vmatpush.bf16.msra.mxu0 %v308
    %450 = vmatpush.bf16.msra.mxu0 %v300
    %451 = vmatpush.bf16.msra.mxu0 %v292
    %452 = vmatmul.bf16.gmra.mxu0 %v15
    %v453 = vpop.f32.mrf.mxu0
    %v454 = vadd.f32 %v84, %v453
    %v455 = vpop.f32.mrf.mxu0
    %456 = vdwg.mxu0
    %457 = vmatpush.bf16.msra.mxu0 %v349
    %458 = vmatpush.bf16.msra.mxu0 %v341
    %459 = vmatpush.bf16.msra.mxu0 %v333
    %460 = vmatpush.bf16.msra.mxu0 %v325
    %461 = vmatpush.bf16.msra.mxu0 %v317
    %462 = vmatpush.bf16.msra.mxu0 %v309
    %463 = vmatpush.bf16.msra.mxu0 %v301
    %464 = vmatpush.bf16.msra.mxu0 %v293
    %465 = vmatmul.bf16.gmra.mxu0 %v15
    %v466 = vpop.f32.mrf.mxu0
    %v467 = vadd.f32 %v85, %v466
    %v468 = vpop.f32.mrf.mxu0
    %469 = vdwg.mxu0
    %470 = vmatpush.bf16.msra.mxu0 %v350
    %471 = vmatpush.bf16.msra.mxu0 %v342
    %472 = vmatpush.bf16.msra.mxu0 %v334
    %473 = vmatpush.bf16.msra.mxu0 %v326
    %474 = vmatpush.bf16.msra.mxu0 %v318
    %475 = vmatpush.bf16.msra.mxu0 %v310
    %476 = vmatpush.bf16.msra.mxu0 %v302
    %477 = vmatpush.bf16.msra.mxu0 %v294
    %478 = vmatmul.bf16.gmra.mxu0 %v15
    %v479 = vpop.f32.mrf.mxu0
    %v480 = vadd.f32 %v86, %v479
    %v481 = vpop.f32.mrf.mxu0
    %482 = vdwg.mxu0
    %483 = vmatpush.bf16.msra.mxu0 %v351
    %484 = vmatpush.bf16.msra.mxu0 %v343
    %485 = vmatpush.bf16.msra.mxu0 %v335
    %486 = vmatpush.bf16.msra.mxu0 %v327
    %487 = vmatpush.bf16.msra.mxu0 %v319
    %488 = vmatpush.bf16.msra.mxu0 %v311
    %489 = vmatpush.bf16.msra.mxu0 %v303
    %490 = vmatpush.bf16.msra.mxu0 %v295
    %491 = vmatmul.bf16.gmra.mxu0 %v15
    %v492 = vpop.f32.mrf.mxu0
    %v493 = vadd.f32 %v87, %v492
    %v494 = vpop.f32.mrf.mxu0
    %495 = vdwg.mxu0
    %496 = vmatpush.bf16.msra.mxu0 %v352
    %497 = vmatpush.bf16.msra.mxu0 %v344
    %498 = vmatpush.bf16.msra.mxu0 %v336
    %499 = vmatpush.bf16.msra.mxu0 %v328
    %500 = vmatpush.bf16.msra.mxu0 %v320
    %501 = vmatpush.bf16.msra.mxu0 %v312
    %502 = vmatpush.bf16.msra.mxu0 %v304
    %503 = vmatpush.bf16.msra.mxu0 %v296
    %504 = vmatmul.bf16.gmra.mxu0 %v15
    %v505 = vpop.f32.mrf.mxu0
    %v506 = vadd.f32 %v88, %v505
    %v507 = vpop.f32.mrf.mxu0
    %508 = vdwg.mxu0
    %509 = vmatpush.bf16.msra.mxu0 %v353
    %510 = vmatpush.bf16.msra.mxu0 %v345
    %511 = vmatpush.bf16.msra.mxu0 %v337
    %512 = vmatpush.bf16.msra.mxu0 %v329
    %513 = vmatpush.bf16.msra.mxu0 %v321
    %514 = vmatpush.bf16.msra.mxu0 %v313
    %515 = vmatpush.bf16.msra.mxu0 %v305
    %516 = vmatpush.bf16.msra.mxu0 %v297
    %517 = vmatmul.bf16.gmra.mxu0 %v15
    %v518 = vpop.f32.mrf.mxu0
    %v519 = vadd.f32 %v89, %v518
    %v520 = vpop.f32.mrf.mxu0
    %521 = vdwg.mxu0
    %522 = vst [vmem:[#allocation2] sm:$0xff] %v428
    %523 = vst [vmem:[#allocation2 + $0x8] sm:$0xff] %v441
    %524 = vst [vmem:[#allocation2 + $0x10] sm:$0xff] %v454
    %525 = vst [vmem:[#allocation2 + $0x18] sm:$0xff] %v467
    %526 = vst [vmem:[#allocation2 + $0x20] sm:$0xff] %v480
    %527 = vst [vmem:[#allocation2 + $0x28] sm:$0xff] %v493
    %528 = vst [vmem:[#allocation2 + $0x30] sm:$0xff] %v506
    %529 = vst [vmem:[#allocation2 + $0x38] sm:$0xff] %v519
    // Predicated region
    $region14: #{session_recommender_forward.3} parent=1 // pred_check
      _
    $region15: #{session_recommender_forward.3} parent=1 // pred_check_branch
      %531 = sbr.rel (0) target = $region17
    $region16: #{session_recommender_forward.3} parent=1 // pred_region
      %533 = vsyncadd [#allocation3], 0
      %s535 = sshll.u32 [#allocation2], 4
      %s536 = int_to_ptr.vmem [resolvable:$true] %s535
      %s537 = sshll.u32 %s3, 4
      %s538 = int_to_ptr.hbm [resolvable:$true] %s537
      %540 = dma.vmem_to_hbm [thread:$0]  %s536, 1024, %s538, [#allocation3]
    $region17: #{session_recommender_forward.3} parent=1 // pred_fallthru
      _
    // Predicated region
    $region18: #{session_recommender_forward.3} parent=1 // pred_check
      _
    $region19: #{session_recommender_forward.3} parent=1 // pred_check_branch
      %542 = sbr.rel (0) target = $region21
    $region20: #{session_recommender_forward.3} parent=1 // pred_region
      %544 = dma.done [#allocation3], 1024
    $region21: #{session_recommender_forward.3} parent=1 // pred_fallthru
      _
    %545 = vsyncpa [#allocation3], 1

// kernel: session_recommender_forward.2
$region0: #{session_recommender_forward.2}
  #allocation0 [shape = 'u32[]', space=smem, size = 0x4, offset = 0x4, fixed_abs, tag = 'smem constant byte address 0x4 - core index']
  #allocation1 [shape = 'u32[72,128]{1,0:T(1,128)}', space=vmem, size = 0x9000, scoped, tag = 'internal scratch']
  #allocation2 [shape = 'f32[8,8,384]{2,1,0:T(8,128)}', space=vmem, size = 0x18000, scoped, tag = 'scratch operand']
  #allocation3 [shape = 'f32[8,8,128]{2,1,0:T(8,128)}', space=vmem, size = 0x8000, scoped, tag = 'scratch operand']
  #allocation4 [shape = 'f32[1,1]{1,0:T(1,128)S(1)}', space=vmem, size = 0x200, scoped, tag = 'scoped memory for session_recommender_forward.2']
  %s0 = inlined_call_operand.vmem [shape: bf16[8,8,128], index: 0, kind: input, shape index: {}]
  %s1 = inlined_call_operand.vmem [shape: bf16[128,384], index: 1, kind: input, shape index: {}]
  %s2 = inlined_call_operand.vmem [shape: bf16[128,384], index: 2, kind: input, shape index: {}]
  %s3 = inlined_call_operand.vmem [shape: f32[1,384], index: 3, kind: input, shape index: {}]
  %s4 = inlined_call_operand.vmem [shape: f32[1,128], index: 4, kind: input, shape index: {}]
  %s5 = inlined_call_operand.vmem [shape: f32[1,128], index: 5, kind: input, shape index: {}]
  %s6 = inlined_call_operand.<no memory space> [shape: f32[1,1], index: 6, kind: input, shape index: {}]
  %s7 = inlined_call_operand.vmem [shape: bf16[8,128], index: 7, kind: output, shape index: {}]
  %s8 = sld [smem:[#allocation0]]
  $region38: #{session_recommender_forward.2} parent=0
    _
  %s10 = ssub.s32 1, %s8
  %s11 = scalar_select 0, %s10, %s8
  %v12 = vstv %s6
  %13 = vst [vmem:[#allocation4] sm:$0x1] %v12
  // Predicated region
  $region2: #{session_recommender_forward.2} parent=0 // pred_check
    _
  $region3: #{session_recommender_forward.2} parent=0 // pred_check_branch
    %15 = sbr.rel (0) target = $region5
  $region4: #{session_recommender_forward.2} parent=0 // pred_region
    _
  $region5: #{session_recommender_forward.2} parent=0 // pred_fallthru
    _
  // Predicated region
  $region6: #{session_recommender_forward.2} parent=0 // pred_check
    _
  $region7: #{session_recommender_forward.2} parent=0 // pred_check_branch
    %17 = sbr.rel (0) target = $region9
  $region8: #{session_recommender_forward.2} parent=0 // pred_region
    _
  $region9: #{session_recommender_forward.2} parent=0 // pred_fallthru
    _
  // Predicated region
  $region10: #{session_recommender_forward.2} parent=0 // pred_check
    _
  $region11: #{session_recommender_forward.2} parent=0 // pred_check_branch
    %19 = sbr.rel (0) target = $region13
  $region12: #{session_recommender_forward.2} parent=0 // pred_region
    _
  $region13: #{session_recommender_forward.2} parent=0 // pred_fallthru
    _
  // Predicated region
  $region14: #{session_recommender_forward.2} parent=0 // pred_check
    _
  $region15: #{session_recommender_forward.2} parent=0 // pred_check_branch
    %21 = sbr.rel (0) target = $region17
  $region16: #{session_recommender_forward.2} parent=0 // pred_region
    _
  $region17: #{session_recommender_forward.2} parent=0 // pred_fallthru
    _
  // Predicated region
  $region18: #{session_recommender_forward.2} parent=0 // pred_check
    _
  $region19: #{session_recommender_forward.2} parent=0 // pred_check_branch
    %23 = sbr.rel (0) target = $region21
  $region20: #{session_recommender_forward.2} parent=0 // pred_region
    _
  $region21: #{session_recommender_forward.2} parent=0 // pred_fallthru
    _
  // Predicated region
  $region22: #{session_recommender_forward.2} parent=0 // pred_check
    _
  $region23: #{session_recommender_forward.2} parent=0 // pred_check_branch
    %25 = sbr.rel (0) target = $region25
  $region24: #{session_recommender_forward.2} parent=0 // pred_region
    _
  $region25: #{session_recommender_forward.2} parent=0 // pred_fallthru
    _
  // Predicated region
  $region26: #{session_recommender_forward.2} parent=0 // pred_check
    _
  $region27: #{session_recommender_forward.2} parent=0 // pred_check_branch
    %27 = sbr.rel (0) target = $region29
  $region28: #{session_recommender_forward.2} parent=0 // pred_region
    _
  $region29: #{session_recommender_forward.2} parent=0 // pred_fallthru
    _
  %v29 = vld [vmem:[%s0] sm:$0xf]
  %v30 = vld [vmem:[%s0 + $0x4] sm:$0xf]
  %v31 = vld [vmem:[%s0 + $0x8] sm:$0xf]
  %v32 = vld [vmem:[%s0 + $0xc] sm:$0xf]
  %v33 = vld [vmem:[%s0 + $0x10] sm:$0xf]
  %v34 = vld [vmem:[%s0 + $0x14] sm:$0xf]
  %v35 = vld [vmem:[%s0 + $0x18] sm:$0xf]
  %v36 = vld [vmem:[%s0 + $0x1c] sm:$0xf]
  %v37 = vld [vmem:[%s1] sm:$0xff]
  %v38 = vld [vmem:[%s1 + $0x8] sm:$0xf]
  %v39 = vld [vmem:[%s1 + $0xc] sm:$0xff]
  %v40 = vld [vmem:[%s1 + $0x14] sm:$0xf]
  %v41 = vld [vmem:[%s1 + $0x18] sm:$0xff]
  %v42 = vld [vmem:[%s1 + $0x20] sm:$0xf]
  %v43 = vld [vmem:[%s1 + $0x24] sm:$0xff]
  %v44 = vld [vmem:[%s1 + $0x2c] sm:$0xf]
  %v45 = vld [vmem:[%s1 + $0x30] sm:$0xff]
  %v46 = vld [vmem:[%s1 + $0x38] sm:$0xf]
  %v47 = vld [vmem:[%s1 + $0x3c] sm:$0xff]
  %v48 = vld [vmem:[%s1 + $0x44] sm:$0xf]
  %v49 = vld [vmem:[%s1 + $0x48] sm:$0xff]
  %v50 = vld [vmem:[%s1 + $0x50] sm:$0xf]
  %v51 = vld [vmem:[%s1 + $0x54] sm:$0xff]
  %v52 = vld [vmem:[%s1 + $0x5c] sm:$0xf]
  %v53 = vld [vmem:[%s1 + $0x60] sm:$0xff]
  %v54 = vld [vmem:[%s1 + $0x68] sm:$0xf]
  %v55 = vld [vmem:[%s1 + $0x6c] sm:$0xff]
  %v56 = vld [vmem:[%s1 + $0x74] sm:$0xf]
  %v57 = vld [vmem:[%s1 + $0x78] sm:$0xff]
  %v58 = vld [vmem:[%s1 + $0x80] sm:$0xf]
  %v59 = vld [vmem:[%s1 + $0x84] sm:$0xff]
  %v60 = vld [vmem:[%s1 + $0x8c] sm:$0xf]
  %v61 = vld [vmem:[%s1 + $0x90] sm:$0xff]
  %v62 = vld [vmem:[%s1 + $0x98] sm:$0xf]
  %v63 = vld [vmem:[%s1 + $0x9c] sm:$0xff]
  %v64 = vld [vmem:[%s1 + $0xa4] sm:$0xf]
  %v65 = vld [vmem:[%s1 + $0xa8] sm:$0xff]
  %v66 = vld [vmem:[%s1 + $0xb0] sm:$0xf]
  %v67 = vld [vmem:[%s1 + $0xb4] sm:$0xff]
  %v68 = vld [vmem:[%s1 + $0xbc] sm:$0xf]
  %v69 = vld [vmem:[%s3] sm:$0x7]
  %v71 = vperm.slane %v69, 0
  %v72 = vperm.slane %v69, 1
  %v73 = vperm.slane %v69, 2
  %v85 = vunpack.c.l.b16 %v29
  %v86 = vunpack.c.l.b16 %v30
  %v87 = vunpack.c.l.b16 %v31
  %v88 = vunpack.c.l.b16 %v32
  %v89 = vunpack.c.l.b16 %v33
  %v90 = vunpack.c.l.b16 %v34
  %v91 = vunpack.c.l.b16 %v35
  %v92 = vunpack.c.l.b16 %v36
  %v93 = vpack.c.b16 %v86, %v85
  %v94 = vpack.c.b16 %v88, %v87
  %v95 = vpack.c.b16 %v90, %v89
  %v96 = vpack.c.b16 %v92, %v91
  %v133 = vunpack.c.l.b16 %v37
  %v134 = vunpack.c.h.b16 %v37
  %v135 = vunpack.c.l.b16 %v38
  %v136 = vunpack.c.l.b16 %v39
  %v137 = vunpack.c.h.b16 %v39
  %v138 = vunpack.c.l.b16 %v40
  %v139 = vunpack.c.l.b16 %v41
  %v140 = vunpack.c.h.b16 %v41
  %v141 = vunpack.c.l.b16 %v42
  %v142 = vunpack.c.l.b16 %v43
  %v143 = vunpack.c.h.b16 %v43
  %v144 = vunpack.c.l.b16 %v44
  %v145 = vunpack.c.l.b16 %v45
  %v146 = vunpack.c.h.b16 %v45
  %v147 = vunpack.c.l.b16 %v46
  %v148 = vunpack.c.l.b16 %v47
  %v149 = vunpack.c.h.b16 %v47
  %v150 = vunpack.c.l.b16 %v48
  %v151 = vunpack.c.l.b16 %v49
  %v152 = vunpack.c.h.b16 %v49
  %v153 = vunpack.c.l.b16 %v50
  %v154 = vunpack.c.l.b16 %v51
  %v155 = vunpack.c.h.b16 %v51
  %v156 = vunpack.c.l.b16 %v52
  %v157 = vunpack.c.l.b16 %v53
  %v158 = vunpack.c.h.b16 %v53
  %v159 = vunpack.c.l.b16 %v54
  %v160 = vunpack.c.l.b16 %v55
  %v161 = vunpack.c.h.b16 %v55
  %v162 = vunpack.c.l.b16 %v56
  %v163 = vunpack.c.l.b16 %v57
  %v164 = vunpack.c.h.b16 %v57
  %v165 = vunpack.c.l.b16 %v58
  %v166 = vunpack.c.l.b16 %v59
  %v167 = vunpack.c.h.b16 %v59
  %v168 = vunpack.c.l.b16 %v60
  %v169 = vunpack.c.l.b16 %v61
  %v170 = vunpack.c.h.b16 %v61
  %v171 = vunpack.c.l.b16 %v62
  %v172 = vunpack.c.l.b16 %v63
  %v173 = vunpack.c.h.b16 %v63
  %v174 = vunpack.c.l.b16 %v64
  %v175 = vunpack.c.l.b16 %v65
  %v176 = vunpack.c.h.b16 %v65
  %v177 = vunpack.c.l.b16 %v66
  %v178 = vunpack.c.l.b16 %v67
  %v179 = vunpack.c.h.b16 %v67
  %v180 = vunpack.c.l.b16 %v68
  %v181 = vpack.c.b16 %v136, %v133
  %v182 = vpack.c.b16 %v137, %v134
  %v183 = vpack.c.b16 %v138, %v135
  %v184 = vpack.c.b16 %v142, %v139
  %v185 = vpack.c.b16 %v143, %v140
  %v186 = vpack.c.b16 %v144, %v141
  %v187 = vpack.c.b16 %v148, %v145
  %v188 = vpack.c.b16 %v149, %v146
  %v189 = vpack.c.b16 %v150, %v147
  %v190 = vpack.c.b16 %v154, %v151
  %v191 = vpack.c.b16 %v155, %v152
  %v192 = vpack.c.b16 %v156, %v153
  %v193 = vpack.c.b16 %v160, %v157
  %v194 = vpack.c.b16 %v161, %v158
  %v195 = vpack.c.b16 %v162, %v159
  %v196 = vpack.c.b16 %v166, %v163
  %v197 = vpack.c.b16 %v167, %v164
  %v198 = vpack.c.b16 %v168, %v165
  %v199 = vpack.c.b16 %v172, %v169
  %v200 = vpack.c.b16 %v173, %v170
  %v201 = vpack.c.b16 %v174, %v171
  %v202 = vpack.c.b16 %v178, %v175
  %v203 = vpack.c.b16 %v179, %v176
  %v204 = vpack.c.b16 %v180, %v177
  %229 = vmatpush.bf16.msra.mxu0 %v202
  %230 = vmatpush.bf16.msra.mxu0 %v199
  %231 = vmatpush.bf16.msra.mxu0 %v196
  %232 = vmatpush.bf16.msra.mxu0 %v193
  %233 = vmatpush.bf16.msra.mxu0 %v190
  %234 = vmatpush.bf16.msra.mxu0 %v187
  %235 = vmatpush.bf16.msra.mxu0 %v184
  %236 = vmatpush.bf16.msra.mxu0 %v181
  %237 = vmatmul.bf16.gmra.mxu0 %v93
  %v238 = vpop.f32.mrf.mxu0
  %v239 = vadd.f32 %v71, %v238
  %v240 = vpop.f32.mrf.mxu0
  %v241 = vadd.f32 %v71, %v240
  %242 = vmatmul.bf16.gmra.mxu0 %v94
  %v243 = vpop.f32.mrf.mxu0
  %v244 = vadd.f32 %v71, %v243
  %v245 = vpop.f32.mrf.mxu0
  %v246 = vadd.f32 %v71, %v245
  %247 = vmatmul.bf16.gmra.mxu0 %v95
  %v248 = vpop.f32.mrf.mxu0
  %v249 = vadd.f32 %v71, %v248
  %v250 = vpop.f32.mrf.mxu0
  %v251 = vadd.f32 %v71, %v250
  %252 = vmatmul.bf16.gmra.mxu0 %v96
  %v253 = vpop.f32.mrf.mxu0
  %v254 = vadd.f32 %v71, %v253
  %v255 = vpop.f32.mrf.mxu0
  %v256 = vadd.f32 %v71, %v255
  %257 = vdwg.mxu0
  %258 = vmatpush.bf16.msra.mxu0 %v203
  %259 = vmatpush.bf16.msra.mxu0 %v200
  %260 = vmatpush.bf16.msra.mxu0 %v197
  %261 = vmatpush.bf16.msra.mxu0 %v194
  %262 = vmatpush.bf16.msra.mxu0 %v191
  %263 = vmatpush.bf16.msra.mxu0 %v188
  %264 = vmatpush.bf16.msra.mxu0 %v185
  %265 = vmatpush.bf16.msra.mxu0 %v182
  %266 = vmatmul.bf16.gmra.mxu0 %v93
  %v267 = vpop.f32.mrf.mxu0
  %v268 = vadd.f32 %v72, %v267
  %v269 = vpop.f32.mrf.mxu0
  %v270 = vadd.f32 %v72, %v269
  %271 = vmatmul.bf16.gmra.mxu0 %v94
  %v272 = vpop.f32.mrf.mxu0
  %v273 = vadd.f32 %v72, %v272
  %v274 = vpop.f32.mrf.mxu0
  %v275 = vadd.f32 %v72, %v274
  %276 = vmatmul.bf16.gmra.mxu0 %v95
  %v277 = vpop.f32.mrf.mxu0
  %v278 = vadd.f32 %v72, %v277
  %v279 = vpop.f32.mrf.mxu0
  %v280 = vadd.f32 %v72, %v279
  %281 = vmatmul.bf16.gmra.mxu0 %v96
  %v282 = vpop.f32.mrf.mxu0
  %v283 = vadd.f32 %v72, %v282
  %v284 = vpop.f32.mrf.mxu0
  %v285 = vadd.f32 %v72, %v284
  %286 = vdwg.mxu0
  %287 = vmatpush.bf16.msra.mxu0 %v204
  %288 = vmatpush.bf16.msra.mxu0 %v201
  %289 = vmatpush.bf16.msra.mxu0 %v198
  %290 = vmatpush.bf16.msra.mxu0 %v195
  %291 = vmatpush.bf16.msra.mxu0 %v192
  %292 = vmatpush.bf16.msra.mxu0 %v189
  %293 = vmatpush.bf16.msra.mxu0 %v186
  %294 = vmatpush.bf16.msra.mxu0 %v183
  %295 = vmatmul.bf16.gmra.mxu0 %v93
  %v296 = vpop.f32.mrf.mxu0
  %v297 = vadd.f32 %v73, %v296
  %v298 = vpop.f32.mrf.mxu0
  %v299 = vadd.f32 %v73, %v298
  %300 = vmatmul.bf16.gmra.mxu0 %v94
  %v301 = vpop.f32.mrf.mxu0
  %v302 = vadd.f32 %v73, %v301
  %v303 = vpop.f32.mrf.mxu0
  %v304 = vadd.f32 %v73, %v303
  %305 = vmatmul.bf16.gmra.mxu0 %v95
  %v306 = vpop.f32.mrf.mxu0
  %v307 = vadd.f32 %v73, %v306
  %v308 = vpop.f32.mrf.mxu0
  %v309 = vadd.f32 %v73, %v308
  %310 = vmatmul.bf16.gmra.mxu0 %v96
  %v311 = vpop.f32.mrf.mxu0
  %v312 = vadd.f32 %v73, %v311
  %v313 = vpop.f32.mrf.mxu0
  %v314 = vadd.f32 %v73, %v313
  %315 = vdwg.mxu0
  %316 = vst [vmem:[#allocation2] sm:$0xff] %v239
  %317 = vst [vmem:[#allocation2 + $0x8] sm:$0xff] %v268
  %318 = vst [vmem:[#allocation2 + $0x10] sm:$0xff] %v297
  %319 = vst [vmem:[#allocation2 + $0x18] sm:$0xff] %v241
  %320 = vst [vmem:[#allocation2 + $0x20] sm:$0xff] %v270
  %321 = vst [vmem:[#allocation2 + $0x28] sm:$0xff] %v299
  %322 = vst [vmem:[#allocation2 + $0x30] sm:$0xff] %v244
  %323 = vst [vmem:[#allocation2 + $0x38] sm:$0xff] %v273
  %324 = vst [vmem:[#allocation2 + $0x40] sm:$0xff] %v302
  %325 = vst [vmem:[#allocation2 + $0x48] sm:$0xff] %v246
  %326 = vst [vmem:[#allocation2 + $0x50] sm:$0xff] %v275
  %327 = vst [vmem:[#allocation2 + $0x58] sm:$0xff] %v304
  %328 = vst [vmem:[#allocation2 + $0x60] sm:$0xff] %v249
  %329 = vst [vmem:[#allocation2 + $0x68] sm:$0xff] %v278
  %330 = vst [vmem:[#allocation2 + $0x70] sm:$0xff] %v307
  %331 = vst [vmem:[#allocation2 + $0x78] sm:$0xff] %v251
  %332 = vst [vmem:[#allocation2 + $0x80] sm:$0xff] %v280
  %333 = vst [vmem:[#allocation2 + $0x88] sm:$0xff] %v309
  %334 = vst [vmem:[#allocation2 + $0x90] sm:$0xff] %v254
  %335 = vst [vmem:[#allocation2 + $0x98] sm:$0xff] %v283
  %336 = vst [vmem:[#allocation2 + $0xa0] sm:$0xff] %v312
  %337 = vst [vmem:[#allocation2 + $0xa8] sm:$0xff] %v256
  %338 = vst [vmem:[#allocation2 + $0xb0] sm:$0xff] %v285
  %339 = vst [vmem:[#allocation2 + $0xb8] sm:$0xff] %v314
  %v340 = vld [vmem:[%s2] sm:$0xff]
  %v341 = vld [vmem:[%s2 + $0x8] sm:$0xf]
  %v342 = vld [vmem:[%s2 + $0xc] sm:$0xff]
  %v343 = vld [vmem:[%s2 + $0x14] sm:$0xf]
  %v344 = vld [vmem:[%s2 + $0x18] sm:$0xff]
  %v345 = vld [vmem:[%s2 + $0x20] sm:$0xf]
  %v346 = vld [vmem:[%s2 + $0x24] sm:$0xff]
  %v347 = vld [vmem:[%s2 + $0x2c] sm:$0xf]
  %v348 = vld [vmem:[%s2 + $0x30] sm:$0xff]
  %v349 = vld [vmem:[%s2 + $0x38] sm:$0xf]
  %v350 = vld [vmem:[%s2 + $0x3c] sm:$0xff]
  %v351 = vld [vmem:[%s2 + $0x44] sm:$0xf]
  %v352 = vld [vmem:[%s2 + $0x48] sm:$0xff]
  %v353 = vld [vmem:[%s2 + $0x50] sm:$0xf]
  %v354 = vld [vmem:[%s2 + $0x54] sm:$0xff]
  %v355 = vld [vmem:[%s2 + $0x5c] sm:$0xf]
  %v356 = vld [vmem:[%s2 + $0x60] sm:$0xff]
  %v357 = vld [vmem:[%s2 + $0x68] sm:$0xf]
  %v358 = vld [vmem:[%s2 + $0x6c] sm:$0xff]
  %v359 = vld [vmem:[%s2 + $0x74] sm:$0xf]
  %v360 = vld [vmem:[%s2 + $0x78] sm:$0xff]
  %v361 = vld [vmem:[%s2 + $0x80] sm:$0xf]
  %v362 = vld [vmem:[%s2 + $0x84] sm:$0xff]
  %v363 = vld [vmem:[%s2 + $0x8c] sm:$0xf]
  %v364 = vld [vmem:[%s2 + $0x90] sm:$0xff]
  %v365 = vld [vmem:[%s2 + $0x98] sm:$0xf]
  %v366 = vld [vmem:[%s2 + $0x9c] sm:$0xff]
  %v367 = vld [vmem:[%s2 + $0xa4] sm:$0xf]
  %v368 = vld [vmem:[%s2 + $0xa8] sm:$0xff]
  %v369 = vld [vmem:[%s2 + $0xb0] sm:$0xf]
  %v370 = vld [vmem:[%s2 + $0xb4] sm:$0xff]
  %v371 = vld [vmem:[%s2 + $0xbc] sm:$0xf]
  %v372 = vld [vmem:[%s4] sm:$0x1]
  %v373 = vld [vmem:[#allocation2] sm:$0xff]
  %v374 = vld [vmem:[#allocation2 + $0x8] sm:$0xff]
  %v375 = vld [vmem:[#allocation2 + $0x10] sm:$0xff]
  %v408 = vunpack.c.l.b16 %v340
  %v409 = vunpack.c.h.b16 %v340
  %v410 = vunpack.c.l.b16 %v341
  %v411 = vunpack.c.l.b16 %v342
  %v412 = vunpack.c.h.b16 %v342
  %v413 = vunpack.c.l.b16 %v343
  %v414 = vunpack.c.l.b16 %v344
  %v415 = vunpack.c.h.b16 %v344
  %v416 = vunpack.c.l.b16 %v345
  %v417 = vunpack.c.l.b16 %v346
  %v418 = vunpack.c.h.b16 %v346
  %v419 = vunpack.c.l.b16 %v347
  %v420 = vunpack.c.l.b16 %v348
  %v421 = vunpack.c.h.b16 %v348
  %v422 = vunpack.c.l.b16 %v349
  %v423 = vunpack.c.l.b16 %v350
  %v424 = vunpack.c.h.b16 %v350
  %v425 = vunpack.c.l.b16 %v351
  %v426 = vunpack.c.l.b16 %v352
  %v427 = vunpack.c.h.b16 %v352
  %v428 = vunpack.c.l.b16 %v353
  %v429 = vunpack.c.l.b16 %v354
  %v430 = vunpack.c.h.b16 %v354
  %v431 = vunpack.c.l.b16 %v355
  %v432 = vunpack.c.l.b16 %v356
  %v433 = vunpack.c.h.b16 %v356
  %v434 = vunpack.c.l.b16 %v357
  %v435 = vunpack.c.l.b16 %v358
  %v436 = vunpack.c.h.b16 %v358
  %v437 = vunpack.c.l.b16 %v359
  %v438 = vunpack.c.l.b16 %v360
  %v439 = vunpack.c.h.b16 %v360
  %v440 = vunpack.c.l.b16 %v361
  %v441 = vunpack.c.l.b16 %v362
  %v442 = vunpack.c.h.b16 %v362
  %v443 = vunpack.c.l.b16 %v363
  %v444 = vunpack.c.l.b16 %v364
  %v445 = vunpack.c.h.b16 %v364
  %v446 = vunpack.c.l.b16 %v365
  %v447 = vunpack.c.l.b16 %v366
  %v448 = vunpack.c.h.b16 %v366
  %v449 = vunpack.c.l.b16 %v367
  %v450 = vunpack.c.l.b16 %v368
  %v451 = vunpack.c.h.b16 %v368
  %v452 = vunpack.c.l.b16 %v369
  %v453 = vunpack.c.l.b16 %v370
  %v454 = vunpack.c.h.b16 %v370
  %v455 = vunpack.c.l.b16 %v371
  %v456 = vpack.c.b16 %v411, %v408
  %v457 = vpack.c.b16 %v412, %v409
  %v458 = vpack.c.b16 %v413, %v410
  %v459 = vpack.c.b16 %v417, %v414
  %v460 = vpack.c.b16 %v418, %v415
  %v461 = vpack.c.b16 %v419, %v416
  %v462 = vpack.c.b16 %v423, %v420
  %v463 = vpack.c.b16 %v424, %v421
  %v464 = vpack.c.b16 %v425, %v422
  %v465 = vpack.c.b16 %v429, %v426
  %v466 = vpack.c.b16 %v430, %v427
  %v467 = vpack.c.b16 %v431, %v428
  %v468 = vpack.c.b16 %v435, %v432
  %v469 = vpack.c.b16 %v436, %v433
  %v470 = vpack.c.b16 %v437, %v434
  %v471 = vpack.c.b16 %v441, %v438
  %v472 = vpack.c.b16 %v442, %v439
  %v473 = vpack.c.b16 %v443, %v440
  %v474 = vpack.c.b16 %v447, %v444
  %v475 = vpack.c.b16 %v448, %v445
  %v476 = vpack.c.b16 %v449, %v446
  %v477 = vpack.c.b16 %v453, %v450
  %v478 = vpack.c.b16 %v454, %v451
  %v479 = vpack.c.b16 %v455, %v452
  %504 = vmatpush.bf16.msra.mxu0 %v477
  %505 = vmatpush.bf16.msra.mxu0 %v474
  %506 = vmatpush.bf16.msra.mxu0 %v471
  %507 = vmatpush.bf16.msra.mxu0 %v468
  %508 = vmatpush.bf16.msra.mxu0 %v465
  %509 = vmatpush.bf16.msra.mxu0 %v462
  %510 = vmatpush.bf16.msra.mxu0 %v459
  %511 = vmatpush.bf16.msra.mxu0 %v456
  %512 = vmatmul.bf16.gmra.mxu0 0
  %v513 = vpop.f32.mrf.mxu0
  %v514 = vadd.f32 0.0, %v513
  %v515 = vpop.f32.mrf.mxu0
  %516 = vdwg.mxu0
  %517 = vmatpush.bf16.msra.mxu0 %v478
  %518 = vmatpush.bf16.msra.mxu0 %v475
  %519 = vmatpush.bf16.msra.mxu0 %v472
  %520 = vmatpush.bf16.msra.mxu0 %v469
  %521 = vmatpush.bf16.msra.mxu0 %v466
  %522 = vmatpush.bf16.msra.mxu0 %v463
  %523 = vmatpush.bf16.msra.mxu0 %v460
  %524 = vmatpush.bf16.msra.mxu0 %v457
  %525 = vmatmul.bf16.gmra.mxu0 0
  %v526 = vpop.f32.mrf.mxu0
  %v527 = vadd.f32 0.0, %v526
  %v528 = vpop.f32.mrf.mxu0
  %529 = vdwg.mxu0
  %530 = vmatpush.bf16.msra.mxu0 %v479
  %531 = vmatpush.bf16.msra.mxu0 %v476
  %532 = vmatpush.bf16.msra.mxu0 %v473
  %533 = vmatpush.bf16.msra.mxu0 %v470
  %534 = vmatpush.bf16.msra.mxu0 %v467
  %535 = vmatpush.bf16.msra.mxu0 %v464
  %536 = vmatpush.bf16.msra.mxu0 %v461
  %537 = vmatpush.bf16.msra.mxu0 %v458
  %538 = vmatmul.bf16.gmra.mxu0 0
  %v539 = vpop.f32.mrf.mxu0
  %v540 = vadd.f32 0.0, %v539
  %v541 = vpop.f32.mrf.mxu0
  %542 = vdwg.mxu0
  %v543 = vadd.f32 %v373, %v514
  %v544 = vxor.u32 %v543, 2147483648
  %v545 = vmul.f32 %v544, 1.442695
  %v546 = vpow.pop %v545
  %v547 = vadd.f32 %v546, 1.0
  %v548 = vrcp.pop %v547
  %v549 = vmul.f32 %v547, %v548
  %v550 = vsub.f32 1.0, %v549
  %v551 = vmul.f32 %v548, %v550
  %v552 = vadd.f32 %v548, %v551
  %vm553 = vweird.f32 %v547
  %vm554 = vweird.f32 %v548
  %vm555 = vmor %vm553, %vm554
  %v556 = vsel %vm555, %v548, %v552
  %v557 = vand.u32 2147483647, %v547
  %vm558 = vcmp.eq.f32.partialorder %v557, 8.507059e+37
  %v559 = vand.u32 %v547, 2147483648
  %v560 = vor.u32 1.1754944e-38, %v559
  %v561 = vsel %vm558, %v560, %v556
  %v562 = vmul.f32 1.0, %v561
  %v563 = vadd.f32 %v374, %v527
  %v564 = vxor.u32 %v563, 2147483648
  %v565 = vmul.f32 %v564, 1.442695
  %v566 = vpow.pop %v565
  %v567 = vadd.f32 %v566, 1.0
  %v568 = vrcp.pop %v567
  %v569 = vmul.f32 %v567, %v568
  %v570 = vsub.f32 1.0, %v569
  %v571 = vmul.f32 %v568, %v570
  %v572 = vadd.f32 %v568, %v571
  %vm573 = vweird.f32 %v567
  %vm574 = vweird.f32 %v568
  %vm575 = vmor %vm573, %vm574
  %v576 = vsel %vm575, %v568, %v572
  %v577 = vand.u32 2147483647, %v567
  %vm578 = vcmp.eq.f32.partialorder %v577, 8.507059e+37
  %v579 = vand.u32 %v567, 2147483648
  %v580 = vor.u32 1.1754944e-38, %v579
  %v581 = vsel %vm578, %v580, %v576
  %v582 = vmul.f32 1.0, %v581
  %v584 = vperm.slane %v372, 0
  %v586 = vadd.f32 %v540, %v584
  %v587 = vmul.f32 %v562, %v586
  %v588 = vadd.f32 %v375, %v587
  %v589 = vtanh.pop %v588
  %v590 = vsub.f32 0.0, %v589
  %v591 = vmul.f32 %v582, %v590
  %v592 = vadd.f32 %v589, %v591
  %593 = vst [vmem:[#allocation3] sm:$0xff] %v592
  %s594 = scalar_lea.vmem [#allocation2], 24
  %v595 = vld [vmem:[%s594] sm:$0xff]
  %v596 = vld [vmem:[%s594 + $0x8] sm:$0xff]
  %v597 = vld [vmem:[%s594 + $0x10] sm:$0xff]
  %v598 = vpack.c.bf16 %v592, %v592
  %599 = vmatpush.bf16.msra.mxu0 %v477
  %600 = vmatpush.bf16.msra.mxu0 %v474
  %601 = vmatpush.bf16.msra.mxu0 %v471
  %602 = vmatpush.bf16.msra.mxu0 %v468
  %603 = vmatpush.bf16.msra.mxu0 %v465
  %604 = vmatpush.bf16.msra.mxu0 %v462
  %605 = vmatpush.bf16.msra.mxu0 %v459
  %606 = vmatpush.bf16.msra.mxu0 %v456
  %607 = vmatmul.bf16.gmra.mxu0 %v598
  %v608 = vpop.f32.mrf.mxu0
  %v609 = vadd.f32 0.0, %v608
  %v610 = vpop.f32.mrf.mxu0
  %611 = vdwg.mxu0
  %612 = vmatpush.bf16.msra.mxu0 %v478
  %613 = vmatpush.bf16.msra.mxu0 %v475
  %614 = vmatpush.bf16.msra.mxu0 %v472
  %615 = vmatpush.bf16.msra.mxu0 %v469
  %616 = vmatpush.bf16.msra.mxu0 %v466
  %617 = vmatpush.bf16.msra.mxu0 %v463
  %618 = vmatpush.bf16.msra.mxu0 %v460
  %619 = vmatpush.bf16.msra.mxu0 %v457
  %620 = vmatmul.bf16.gmra.mxu0 %v598
  %v621 = vpop.f32.mrf.mxu0
  %v622 = vadd.f32 0.0, %v621
  %v623 = vpop.f32.mrf.mxu0
  %624 = vdwg.mxu0
  %625 = vmatpush.bf16.msra.mxu0 %v479
  %626 = vmatpush.bf16.msra.mxu0 %v476
  %627 = vmatpush.bf16.msra.mxu0 %v473
  %628 = vmatpush.bf16.msra.mxu0 %v470
  %629 = vmatpush.bf16.msra.mxu0 %v467
  %630 = vmatpush.bf16.msra.mxu0 %v464
  %631 = vmatpush.bf16.msra.mxu0 %v461
  %632 = vmatpush.bf16.msra.mxu0 %v458
  %633 = vmatmul.bf16.gmra.mxu0 %v598
  %v634 = vpop.f32.mrf.mxu0
  %v635 = vadd.f32 0.0, %v634
  %v636 = vpop.f32.mrf.mxu0
  %637 = vdwg.mxu0
  %v638 = vadd.f32 %v595, %v609
  %v639 = vxor.u32 %v638, 2147483648
  %v640 = vmul.f32 %v639, 1.442695
  %v641 = vpow.pop %v640
  %v642 = vadd.f32 %v641, 1.0
  %v643 = vrcp.pop %v642
  %v644 = vmul.f32 %v642, %v643
  %v645 = vsub.f32 1.0, %v644
  %v646 = vmul.f32 %v643, %v645
  %v647 = vadd.f32 %v643, %v646
  %vm648 = vweird.f32 %v642
  %vm649 = vweird.f32 %v643
  %vm650 = vmor %vm648, %vm649
  %v651 = vsel %vm650, %v643, %v647
  %v652 = vand.u32 2147483647, %v642
  %vm653 = vcmp.eq.f32.partialorder %v652, 8.507059e+37
  %v654 = vand.u32 %v642, 2147483648
  %v655 = vor.u32 1.1754944e-38, %v654
  %v656 = vsel %vm653, %v655, %v651
  %v657 = vmul.f32 1.0, %v656
  %v658 = vadd.f32 %v596, %v622
  %v659 = vxor.u32 %v658, 2147483648
  %v660 = vmul.f32 %v659, 1.442695
  %v661 = vpow.pop %v660
  %v662 = vadd.f32 %v661, 1.0
  %v663 = vrcp.pop %v662
  %v664 = vmul.f32 %v662, %v663
  %v665 = vsub.f32 1.0, %v664
  %v666 = vmul.f32 %v663, %v665
  %v667 = vadd.f32 %v663, %v666
  %vm668 = vweird.f32 %v662
  %vm669 = vweird.f32 %v663
  %vm670 = vmor %vm668, %vm669
  %v671 = vsel %vm670, %v663, %v667
  %v672 = vand.u32 2147483647, %v662
  %vm673 = vcmp.eq.f32.partialorder %v672, 8.507059e+37
  %v674 = vand.u32 %v662, 2147483648
  %v675 = vor.u32 1.1754944e-38, %v674
  %v676 = vsel %vm673, %v675, %v671
  %v677 = vmul.f32 1.0, %v676
  %v678 = vadd.f32 %v635, %v584
  %v679 = vmul.f32 %v657, %v678
  %v680 = vadd.f32 %v597, %v679
  %v681 = vtanh.pop %v680
  %v682 = vsub.f32 %v592, %v681
  %v683 = vmul.f32 %v677, %v682
  %v684 = vadd.f32 %v681, %v683
  %s685 = scalar_lea.vmem [#allocation3], 8
  %686 = vst [vmem:[%s685] sm:$0xff] %v684
  %s687 = scalar_lea.vmem [#allocation2], 48
  %v688 = vld [vmem:[%s687] sm:$0xff]
  %v689 = vld [vmem:[%s687 + $0x8] sm:$0xff]
  %v690 = vld [vmem:[%s687 + $0x10] sm:$0xff]
  %v691 = vpack.c.bf16 %v684, %v684
  %692 = vmatpush.bf16.msra.mxu0 %v477
  %693 = vmatpush.bf16.msra.mxu0 %v474
  %694 = vmatpush.bf16.msra.mxu0 %v471
  %695 = vmatpush.bf16.msra.mxu0 %v468
  %696 = vmatpush.bf16.msra.mxu0 %v465
  %697 = vmatpush.bf16.msra.mxu0 %v462
  %698 = vmatpush.bf16.msra.mxu0 %v459
  %699 = vmatpush.bf16.msra.mxu0 %v456
  %700 = vmatmul.bf16.gmra.mxu0 %v691
  %v701 = vpop.f32.mrf.mxu0
  %v702 = vadd.f32 0.0, %v701
  %v703 = vpop.f32.mrf.mxu0
  %704 = vdwg.mxu0
  %705 = vmatpush.bf16.msra.mxu0 %v478
  %706 = vmatpush.bf16.msra.mxu0 %v475
  %707 = vmatpush.bf16.msra.mxu0 %v472
  %708 = vmatpush.bf16.msra.mxu0 %v469
  %709 = vmatpush.bf16.msra.mxu0 %v466
  %710 = vmatpush.bf16.msra.mxu0 %v463
  %711 = vmatpush.bf16.msra.mxu0 %v460
  %712 = vmatpush.bf16.msra.mxu0 %v457
  %713 = vmatmul.bf16.gmra.mxu0 %v691
  %v714 = vpop.f32.mrf.mxu0
  %v715 = vadd.f32 0.0, %v714
  %v716 = vpop.f32.mrf.mxu0
  %717 = vdwg.mxu0
  %718 = vmatpush.bf16.msra.mxu0 %v479
  %719 = vmatpush.bf16.msra.mxu0 %v476
  %720 = vmatpush.bf16.msra.mxu0 %v473
  %721 = vmatpush.bf16.msra.mxu0 %v470
  %722 = vmatpush.bf16.msra.mxu0 %v467
  %723 = vmatpush.bf16.msra.mxu0 %v464
  %724 = vmatpush.bf16.msra.mxu0 %v461
  %725 = vmatpush.bf16.msra.mxu0 %v458
  %726 = vmatmul.bf16.gmra.mxu0 %v691
  %v727 = vpop.f32.mrf.mxu0
  %v728 = vadd.f32 0.0, %v727
  %v729 = vpop.f32.mrf.mxu0
  %730 = vdwg.mxu0
  %v731 = vadd.f32 %v688, %v702
  %v732 = vxor.u32 %v731, 2147483648
  %v733 = vmul.f32 %v732, 1.442695
  %v734 = vpow.pop %v733
  %v735 = vadd.f32 %v734, 1.0
  %v736 = vrcp.pop %v735
  %v737 = vmul.f32 %v735, %v736
  %v738 = vsub.f32 1.0, %v737
  %v739 = vmul.f32 %v736, %v738
  %v740 = vadd.f32 %v736, %v739
  %vm741 = vweird.f32 %v735
  %vm742 = vweird.f32 %v736
  %vm743 = vmor %vm741, %vm742
  %v744 = vsel %vm743, %v736, %v740
  %v745 = vand.u32 2147483647, %v735
  %vm746 = vcmp.eq.f32.partialorder %v745, 8.507059e+37
  %v747 = vand.u32 %v735, 2147483648
  %v748 = vor.u32 1.1754944e-38, %v747
  %v749 = vsel %vm746, %v748, %v744
  %v750 = vmul.f32 1.0, %v749
  %v751 = vadd.f32 %v689, %v715
  %v752 = vxor.u32 %v751, 2147483648
  %v753 = vmul.f32 %v752, 1.442695
  %v754 = vpow.pop %v753
  %v755 = vadd.f32 %v754, 1.0
  %v756 = vrcp.pop %v755
  %v757 = vmul.f32 %v755, %v756
  %v758 = vsub.f32 1.0, %v757
  %v759 = vmul.f32 %v756, %v758
  %v760 = vadd.f32 %v756, %v759
  %vm761 = vweird.f32 %v755
  %vm762 = vweird.f32 %v756
  %vm763 = vmor %vm761, %vm762
  %v764 = vsel %vm763, %v756, %v760
  %v765 = vand.u32 2147483647, %v755
  %vm766 = vcmp.eq.f32.partialorder %v765, 8.507059e+37
  %v767 = vand.u32 %v755, 2147483648
  %v768 = vor.u32 1.1754944e-38, %v767
  %v769 = vsel %vm766, %v768, %v764
  %v770 = vmul.f32 1.0, %v769
  %v771 = vadd.f32 %v728, %v584
  %v772 = vmul.f32 %v750, %v771
  %v773 = vadd.f32 %v690, %v772
  %v774 = vtanh.pop %v773
  %v775 = vsub.f32 %v684, %v774
  %v776 = vmul.f32 %v770, %v775
  %v777 = vadd.f32 %v774, %v776
  %s778 = scalar_lea.vmem [#allocation3], 16
  %779 = vst [vmem:[%s778] sm:$0xff] %v777
  %s780 = scalar_lea.vmem [#allocation2], 72
  %v781 = vld [vmem:[%s780] sm:$0xff]
  %v782 = vld [vmem:[%s780 + $0x8] sm:$0xff]
  %v783 = vld [vmem:[%s780 + $0x10] sm:$0xff]
  %v784 = vpack.c.bf16 %v777, %v777
  %785 = vmatpush.bf16.msra.mxu0 %v477
  %786 = vmatpush.bf16.msra.mxu0 %v474
  %787 = vmatpush.bf16.msra.mxu0 %v471
  %788 = vmatpush.bf16.msra.mxu0 %v468
  %789 = vmatpush.bf16.msra.mxu0 %v465
  %790 = vmatpush.bf16.msra.mxu0 %v462
  %791 = vmatpush.bf16.msra.mxu0 %v459
  %792 = vmatpush.bf16.msra.mxu0 %v456
  %793 = vmatmul.bf16.gmra.mxu0 %v784
  %v794 = vpop.f32.mrf.mxu0
  %v795 = vadd.f32 0.0, %v794
  %v796 = vpop.f32.mrf.mxu0
  %797 = vdwg.mxu0
  %798 = vmatpush.bf16.msra.mxu0 %v478
  %799 = vmatpush.bf16.msra.mxu0 %v475
  %800 = vmatpush.bf16.msra.mxu0 %v472
  %801 = vmatpush.bf16.msra.mxu0 %v469
  %802 = vmatpush.bf16.msra.mxu0 %v466
  %803 = vmatpush.bf16.msra.mxu0 %v463
  %804 = vmatpush.bf16.msra.mxu0 %v460
  %805 = vmatpush.bf16.msra.mxu0 %v457
  %806 = vmatmul.bf16.gmra.mxu0 %v784
  %v807 = vpop.f32.mrf.mxu0
  %v808 = vadd.f32 0.0, %v807
  %v809 = vpop.f32.mrf.mxu0
  %810 = vdwg.mxu0
  %811 = vmatpush.bf16.msra.mxu0 %v479
  %812 = vmatpush.bf16.msra.mxu0 %v476
  %813 = vmatpush.bf16.msra.mxu0 %v473
  %814 = vmatpush.bf16.msra.mxu0 %v470
  %815 = vmatpush.bf16.msra.mxu0 %v467
  %816 = vmatpush.bf16.msra.mxu0 %v464
  %817 = vmatpush.bf16.msra.mxu0 %v461
  %818 = vmatpush.bf16.msra.mxu0 %v458
  %819 = vmatmul.bf16.gmra.mxu0 %v784
  %v820 = vpop.f32.mrf.mxu0
  %v821 = vadd.f32 0.0, %v820
  %v822 = vpop.f32.mrf.mxu0
  %823 = vdwg.mxu0
  %v824 = vadd.f32 %v781, %v795
  %v825 = vxor.u32 %v824, 2147483648
  %v826 = vmul.f32 %v825, 1.442695
  %v827 = vpow.pop %v826
  %v828 = vadd.f32 %v827, 1.0
  %v829 = vrcp.pop %v828
  %v830 = vmul.f32 %v828, %v829
  %v831 = vsub.f32 1.0, %v830
  %v832 = vmul.f32 %v829, %v831
  %v833 = vadd.f32 %v829, %v832
  %vm834 = vweird.f32 %v828
  %vm835 = vweird.f32 %v829
  %vm836 = vmor %vm834, %vm835
  %v837 = vsel %vm836, %v829, %v833
  %v838 = vand.u32 2147483647, %v828
  %vm839 = vcmp.eq.f32.partialorder %v838, 8.507059e+37
  %v840 = vand.u32 %v828, 2147483648
  %v841 = vor.u32 1.1754944e-38, %v840
  %v842 = vsel %vm839, %v841, %v837
  %v843 = vmul.f32 1.0, %v842
  %v844 = vadd.f32 %v782, %v808
  %v845 = vxor.u32 %v844, 2147483648
  %v846 = vmul.f32 %v845, 1.442695
  %v847 = vpow.pop %v846
  %v848 = vadd.f32 %v847, 1.0
  %v849 = vrcp.pop %v848
  %v850 = vmul.f32 %v848, %v849
  %v851 = vsub.f32 1.0, %v850
  %v852 = vmul.f32 %v849, %v851
  %v853 = vadd.f32 %v849, %v852
  %vm854 = vweird.f32 %v848
  %vm855 = vweird.f32 %v849
  %vm856 = vmor %vm854, %vm855
  %v857 = vsel %vm856, %v849, %v853
  %v858 = vand.u32 2147483647, %v848
  %vm859 = vcmp.eq.f32.partialorder %v858, 8.507059e+37
  %v860 = vand.u32 %v848, 2147483648
  %v861 = vor.u32 1.1754944e-38, %v860
  %v862 = vsel %vm859, %v861, %v857
  %v863 = vmul.f32 1.0, %v862
  %v864 = vadd.f32 %v821, %v584
  %v865 = vmul.f32 %v843, %v864
  %v866 = vadd.f32 %v783, %v865
  %v867 = vtanh.pop %v866
  %v868 = vsub.f32 %v777, %v867
  %v869 = vmul.f32 %v863, %v868
  %v870 = vadd.f32 %v867, %v869
  %s871 = scalar_lea.vmem [#allocation3], 24
  %872 = vst [vmem:[%s871] sm:$0xff] %v870
  %s873 = scalar_lea.vmem [#allocation2], 96
  %v874 = vld [vmem:[%s873] sm:$0xff]
  %v875 = vld [vmem:[%s873 + $0x8] sm:$0xff]
  %v876 = vld [vmem:[%s873 + $0x10] sm:$0xff]
  %v877 = vpack.c.bf16 %v870, %v870
  %878 = vmatpush.bf16.msra.mxu0 %v477
  %879 = vmatpush.bf16.msra.mxu0 %v474
  %880 = vmatpush.bf16.msra.mxu0 %v471
  %881 = vmatpush.bf16.msra.mxu0 %v468
  %882 = vmatpush.bf16.msra.mxu0 %v465
  %883 = vmatpush.bf16.msra.mxu0 %v462
  %884 = vmatpush.bf16.msra.mxu0 %v459
  %885 = vmatpush.bf16.msra.mxu0 %v456
  %886 = vmatmul.bf16.gmra.mxu0 %v877
  %v887 = vpop.f32.mrf.mxu0
  %v888 = vadd.f32 0.0, %v887
  %v889 = vpop.f32.mrf.mxu0
  %890 = vdwg.mxu0
  %891 = vmatpush.bf16.msra.mxu0 %v478
  %892 = vmatpush.bf16.msra.mxu0 %v475
  %893 = vmatpush.bf16.msra.mxu0 %v472
  %894 = vmatpush.bf16.msra.mxu0 %v469
  %895 = vmatpush.bf16.msra.mxu0 %v466
  %896 = vmatpush.bf16.msra.mxu0 %v463
  %897 = vmatpush.bf16.msra.mxu0 %v460
  %898 = vmatpush.bf16.msra.mxu0 %v457
  %899 = vmatmul.bf16.gmra.mxu0 %v877
  %v900 = vpop.f32.mrf.mxu0
  %v901 = vadd.f32 0.0, %v900
  %v902 = vpop.f32.mrf.mxu0
  %903 = vdwg.mxu0
  %904 = vmatpush.bf16.msra.mxu0 %v479
  %905 = vmatpush.bf16.msra.mxu0 %v476
  %906 = vmatpush.bf16.msra.mxu0 %v473
  %907 = vmatpush.bf16.msra.mxu0 %v470
  %908 = vmatpush.bf16.msra.mxu0 %v467
  %909 = vmatpush.bf16.msra.mxu0 %v464
  %910 = vmatpush.bf16.msra.mxu0 %v461
  %911 = vmatpush.bf16.msra.mxu0 %v458
  %912 = vmatmul.bf16.gmra.mxu0 %v877
  %v913 = vpop.f32.mrf.mxu0
  %v914 = vadd.f32 0.0, %v913
  %v915 = vpop.f32.mrf.mxu0
  %916 = vdwg.mxu0
  %v917 = vadd.f32 %v874, %v888
  %v918 = vxor.u32 %v917, 2147483648
  %v919 = vmul.f32 %v918, 1.442695
  %v920 = vpow.pop %v919
  %v921 = vadd.f32 %v920, 1.0
  %v922 = vrcp.pop %v921
  %v923 = vmul.f32 %v921, %v922
  %v924 = vsub.f32 1.0, %v923
  %v925 = vmul.f32 %v922, %v924
  %v926 = vadd.f32 %v922, %v925
  %vm927 = vweird.f32 %v921
  %vm928 = vweird.f32 %v922
  %vm929 = vmor %vm927, %vm928
  %v930 = vsel %vm929, %v922, %v926
  %v931 = vand.u32 2147483647, %v921
  %vm932 = vcmp.eq.f32.partialorder %v931, 8.507059e+37
  %v933 = vand.u32 %v921, 2147483648
  %v934 = vor.u32 1.1754944e-38, %v933
  %v935 = vsel %vm932, %v934, %v930
  %v936 = vmul.f32 1.0, %v935
  %v937 = vadd.f32 %v875, %v901
  %v938 = vxor.u32 %v937, 2147483648
  %v939 = vmul.f32 %v938, 1.442695
  %v940 = vpow.pop %v939
  %v941 = vadd.f32 %v940, 1.0
  %v942 = vrcp.pop %v941
  %v943 = vmul.f32 %v941, %v942
  %v944 = vsub.f32 1.0, %v943
  %v945 = vmul.f32 %v942, %v944
  %v946 = vadd.f32 %v942, %v945
  %vm947 = vweird.f32 %v941
  %vm948 = vweird.f32 %v942
  %vm949 = vmor %vm947, %vm948
  %v950 = vsel %vm949, %v942, %v946
  %v951 = vand.u32 2147483647, %v941
  %vm952 = vcmp.eq.f32.partialorder %v951, 8.507059e+37
  %v953 = vand.u32 %v941, 2147483648
  %v954 = vor.u32 1.1754944e-38, %v953
  %v955 = vsel %vm952, %v954, %v950
  %v956 = vmul.f32 1.0, %v955
  %v957 = vadd.f32 %v914, %v584
  %v958 = vmul.f32 %v936, %v957
  %v959 = vadd.f32 %v876, %v958
  %v960 = vtanh.pop %v959
  %v961 = vsub.f32 %v870, %v960
  %v962 = vmul.f32 %v956, %v961
  %v963 = vadd.f32 %v960, %v962
  %s964 = scalar_lea.vmem [#allocation3], 32
  %965 = vst [vmem:[%s964] sm:$0xff] %v963
  %s966 = scalar_lea.vmem [#allocation2], 120
  %v967 = vld [vmem:[%s966] sm:$0xff]
  %v968 = vld [vmem:[%s966 + $0x8] sm:$0xff]
  %v969 = vld [vmem:[%s966 + $0x10] sm:$0xff]
  %v970 = vpack.c.bf16 %v963, %v963
  %971 = vmatpush.bf16.msra.mxu0 %v477
  %972 = vmatpush.bf16.msra.mxu0 %v474
  %973 = vmatpush.bf16.msra.mxu0 %v471
  %974 = vmatpush.bf16.msra.mxu0 %v468
  %975 = vmatpush.bf16.msra.mxu0 %v465
  %976 = vmatpush.bf16.msra.mxu0 %v462
  %977 = vmatpush.bf16.msra.mxu0 %v459
  %978 = vmatpush.bf16.msra.mxu0 %v456
  %979 = vmatmul.bf16.gmra.mxu0 %v970
  %v980 = vpop.f32.mrf.mxu0
  %v981 = vadd.f32 0.0, %v980
  %v982 = vpop.f32.mrf.mxu0
  %983 = vdwg.mxu0
  %984 = vmatpush.bf16.msra.mxu0 %v478
  %985 = vmatpush.bf16.msra.mxu0 %v475
  %986 = vmatpush.bf16.msra.mxu0 %v472
  %987 = vmatpush.bf16.msra.mxu0 %v469
  %988 = vmatpush.bf16.msra.mxu0 %v466
  %989 = vmatpush.bf16.msra.mxu0 %v463
  %990 = vmatpush.bf16.msra.mxu0 %v460
  %991 = vmatpush.bf16.msra.mxu0 %v457
  %992 = vmatmul.bf16.gmra.mxu0 %v970
  %v993 = vpop.f32.mrf.mxu0
  %v994 = vadd.f32 0.0, %v993
  %v995 = vpop.f32.mrf.mxu0
  %996 = vdwg.mxu0
  %997 = vmatpush.bf16.msra.mxu0 %v479
  %998 = vmatpush.bf16.msra.mxu0 %v476
  %999 = vmatpush.bf16.msra.mxu0 %v473
  %1000 = vmatpush.bf16.msra.mxu0 %v470
  %1001 = vmatpush.bf16.msra.mxu0 %v467
  %1002 = vmatpush.bf16.msra.mxu0 %v464
  %1003 = vmatpush.bf16.msra.mxu0 %v461
  %1004 = vmatpush.bf16.msra.mxu0 %v458
  %1005 = vmatmul.bf16.gmra.mxu0 %v970
  %v1006 = vpop.f32.mrf.mxu0
  %v1007 = vadd.f32 0.0, %v1006
  %v1008 = vpop.f32.mrf.mxu0
  %1009 = vdwg.mxu0
  %v1010 = vadd.f32 %v967, %v981
  %v1011 = vxor.u32 %v1010, 2147483648
  %v1012 = vmul.f32 %v1011, 1.442695
  %v1013 = vpow.pop %v1012
  %v1014 = vadd.f32 %v1013, 1.0
  %v1015 = vrcp.pop %v1014
  %v1016 = vmul.f32 %v1014, %v1015
  %v1017 = vsub.f32 1.0, %v1016
  %v1018 = vmul.f32 %v1015, %v1017
  %v1019 = vadd.f32 %v1015, %v1018
  %vm1020 = vweird.f32 %v1014
  %vm1021 = vweird.f32 %v1015
  %vm1022 = vmor %vm1020, %vm1021
  %v1023 = vsel %vm1022, %v1015, %v1019
  %v1024 = vand.u32 2147483647, %v1014
  %vm1025 = vcmp.eq.f32.partialorder %v1024, 8.507059e+37
  %v1026 = vand.u32 %v1014, 2147483648
  %v1027 = vor.u32 1.1754944e-38, %v1026
  %v1028 = vsel %vm1025, %v1027, %v1023
  %v1029 = vmul.f32 1.0, %v1028
  %v1030 = vadd.f32 %v968, %v994
  %v1031 = vxor.u32 %v1030, 2147483648
  %v1032 = vmul.f32 %v1031, 1.442695
  %v1033 = vpow.pop %v1032
  %v1034 = vadd.f32 %v1033, 1.0
  %v1035 = vrcp.pop %v1034
  %v1036 = vmul.f32 %v1034, %v1035
  %v1037 = vsub.f32 1.0, %v1036
  %v1038 = vmul.f32 %v1035, %v1037
  %v1039 = vadd.f32 %v1035, %v1038
  %vm1040 = vweird.f32 %v1034
  %vm1041 = vweird.f32 %v1035
  %vm1042 = vmor %vm1040, %vm1041
  %v1043 = vsel %vm1042, %v1035, %v1039
  %v1044 = vand.u32 2147483647, %v1034
  %vm1045 = vcmp.eq.f32.partialorder %v1044, 8.507059e+37
  %v1046 = vand.u32 %v1034, 2147483648
  %v1047 = vor.u32 1.1754944e-38, %v1046
  %v1048 = vsel %vm1045, %v1047, %v1043
  %v1049 = vmul.f32 1.0, %v1048
  %v1050 = vadd.f32 %v1007, %v584
  %v1051 = vmul.f32 %v1029, %v1050
  %v1052 = vadd.f32 %v969, %v1051
  %v1053 = vtanh.pop %v1052
  %v1054 = vsub.f32 %v963, %v1053
  %v1055 = vmul.f32 %v1049, %v1054
  %v1056 = vadd.f32 %v1053, %v1055
  %s1057 = scalar_lea.vmem [#allocation3], 40
  %1058 = vst [vmem:[%s1057] sm:$0xff] %v1056
  %s1059 = scalar_lea.vmem [#allocation2], 144
  %v1060 = vld [vmem:[%s1059] sm:$0xff]
  %v1061 = vld [vmem:[%s1059 + $0x8] sm:$0xff]
  %v1062 = vld [vmem:[%s1059 + $0x10] sm:$0xff]
  %v1063 = vpack.c.bf16 %v1056, %v1056
  %1064 = vmatpush.bf16.msra.mxu0 %v477
  %1065 = vmatpush.bf16.msra.mxu0 %v474
  %1066 = vmatpush.bf16.msra.mxu0 %v471
  %1067 = vmatpush.bf16.msra.mxu0 %v468
  %1068 = vmatpush.bf16.msra.mxu0 %v465
  %1069 = vmatpush.bf16.msra.mxu0 %v462
  %1070 = vmatpush.bf16.msra.mxu0 %v459
  %1071 = vmatpush.bf16.msra.mxu0 %v456
  %1072 = vmatmul.bf16.gmra.mxu0 %v1063
  %v1073 = vpop.f32.mrf.mxu0
  %v1074 = vadd.f32 0.0, %v1073
  %v1075 = vpop.f32.mrf.mxu0
  %1076 = vdwg.mxu0
  %1077 = vmatpush.bf16.msra.mxu0 %v478
  %1078 = vmatpush.bf16.msra.mxu0 %v475
  %1079 = vmatpush.bf16.msra.mxu0 %v472
  %1080 = vmatpush.bf16.msra.mxu0 %v469
  %1081 = vmatpush.bf16.msra.mxu0 %v466
  %1082 = vmatpush.bf16.msra.mxu0 %v463
  %1083 = vmatpush.bf16.msra.mxu0 %v460
  %1084 = vmatpush.bf16.msra.mxu0 %v457
  %1085 = vmatmul.bf16.gmra.mxu0 %v1063
  %v1086 = vpop.f32.mrf.mxu0
  %v1087 = vadd.f32 0.0, %v1086
  %v1088 = vpop.f32.mrf.mxu0
  %1089 = vdwg.mxu0
  %1090 = vmatpush.bf16.msra.mxu0 %v479
  %1091 = vmatpush.bf16.msra.mxu0 %v476
  %1092 = vmatpush.bf16.msra.mxu0 %v473
  %1093 = vmatpush.bf16.msra.mxu0 %v470
  %1094 = vmatpush.bf16.msra.mxu0 %v467
  %1095 = vmatpush.bf16.msra.mxu0 %v464
  %1096 = vmatpush.bf16.msra.mxu0 %v461
  %1097 = vmatpush.bf16.msra.mxu0 %v458
  %1098 = vmatmul.bf16.gmra.mxu0 %v1063
  %v1099 = vpop.f32.mrf.mxu0
  %v1100 = vadd.f32 0.0, %v1099
  %v1101 = vpop.f32.mrf.mxu0
  %1102 = vdwg.mxu0
  %v1103 = vadd.f32 %v1060, %v1074
  %v1104 = vxor.u32 %v1103, 2147483648
  %v1105 = vmul.f32 %v1104, 1.442695
  %v1106 = vpow.pop %v1105
  %v1107 = vadd.f32 %v1106, 1.0
  %v1108 = vrcp.pop %v1107
  %v1109 = vmul.f32 %v1107, %v1108
  %v1110 = vsub.f32 1.0, %v1109
  %v1111 = vmul.f32 %v1108, %v1110
  %v1112 = vadd.f32 %v1108, %v1111
  %vm1113 = vweird.f32 %v1107
  %vm1114 = vweird.f32 %v1108
  %vm1115 = vmor %vm1113, %vm1114
  %v1116 = vsel %vm1115, %v1108, %v1112
  %v1117 = vand.u32 2147483647, %v1107
  %vm1118 = vcmp.eq.f32.partialorder %v1117, 8.507059e+37
  %v1119 = vand.u32 %v1107, 2147483648
  %v1120 = vor.u32 1.1754944e-38, %v1119
  %v1121 = vsel %vm1118, %v1120, %v1116
  %v1122 = vmul.f32 1.0, %v1121
  %v1123 = vadd.f32 %v1061, %v1087
  %v1124 = vxor.u32 %v1123, 2147483648
  %v1125 = vmul.f32 %v1124, 1.442695
  %v1126 = vpow.pop %v1125
  %v1127 = vadd.f32 %v1126, 1.0
  %v1128 = vrcp.pop %v1127
  %v1129 = vmul.f32 %v1127, %v1128
  %v1130 = vsub.f32 1.0, %v1129
  %v1131 = vmul.f32 %v1128, %v1130
  %v1132 = vadd.f32 %v1128, %v1131
  %vm1133 = vweird.f32 %v1127
  %vm1134 = vweird.f32 %v1128
  %vm1135 = vmor %vm1133, %vm1134
  %v1136 = vsel %vm1135, %v1128, %v1132
  %v1137 = vand.u32 2147483647, %v1127
  %vm1138 = vcmp.eq.f32.partialorder %v1137, 8.507059e+37
  %v1139 = vand.u32 %v1127, 2147483648
  %v1140 = vor.u32 1.1754944e-38, %v1139
  %v1141 = vsel %vm1138, %v1140, %v1136
  %v1142 = vmul.f32 1.0, %v1141
  %v1143 = vadd.f32 %v1100, %v584
  %v1144 = vmul.f32 %v1122, %v1143
  %v1145 = vadd.f32 %v1062, %v1144
  %v1146 = vtanh.pop %v1145
  %v1147 = vsub.f32 %v1056, %v1146
  %v1148 = vmul.f32 %v1142, %v1147
  %v1149 = vadd.f32 %v1146, %v1148
  %s1150 = scalar_lea.vmem [#allocation3], 48
  %1151 = vst [vmem:[%s1150] sm:$0xff] %v1149
  %s1152 = scalar_lea.vmem [#allocation2], 168
  %v1153 = vld [vmem:[%s1152] sm:$0xff]
  %v1154 = vld [vmem:[%s1152 + $0x8] sm:$0xff]
  %v1155 = vld [vmem:[%s1152 + $0x10] sm:$0xff]
  %v1156 = vpack.c.bf16 %v1149, %v1149
  %1157 = vmatpush.bf16.msra.mxu0 %v477
  %1158 = vmatpush.bf16.msra.mxu0 %v474
  %1159 = vmatpush.bf16.msra.mxu0 %v471
  %1160 = vmatpush.bf16.msra.mxu0 %v468
  %1161 = vmatpush.bf16.msra.mxu0 %v465
  %1162 = vmatpush.bf16.msra.mxu0 %v462
  %1163 = vmatpush.bf16.msra.mxu0 %v459
  %1164 = vmatpush.bf16.msra.mxu0 %v456
  %1165 = vmatmul.bf16.gmra.mxu0 %v1156
  %v1166 = vpop.f32.mrf.mxu0
  %v1167 = vadd.f32 0.0, %v1166
  %v1168 = vpop.f32.mrf.mxu0
  %1169 = vdwg.mxu0
  %1170 = vmatpush.bf16.msra.mxu0 %v478
  %1171 = vmatpush.bf16.msra.mxu0 %v475
  %1172 = vmatpush.bf16.msra.mxu0 %v472
  %1173 = vmatpush.bf16.msra.mxu0 %v469
  %1174 = vmatpush.bf16.msra.mxu0 %v466
  %1175 = vmatpush.bf16.msra.mxu0 %v463
  %1176 = vmatpush.bf16.msra.mxu0 %v460
  %1177 = vmatpush.bf16.msra.mxu0 %v457
  %1178 = vmatmul.bf16.gmra.mxu0 %v1156
  %v1179 = vpop.f32.mrf.mxu0
  %v1180 = vadd.f32 0.0, %v1179
  %v1181 = vpop.f32.mrf.mxu0
  %1182 = vdwg.mxu0
  %1183 = vmatpush.bf16.msra.mxu0 %v479
  %1184 = vmatpush.bf16.msra.mxu0 %v476
  %1185 = vmatpush.bf16.msra.mxu0 %v473
  %1186 = vmatpush.bf16.msra.mxu0 %v470
  %1187 = vmatpush.bf16.msra.mxu0 %v467
  %1188 = vmatpush.bf16.msra.mxu0 %v464
  %1189 = vmatpush.bf16.msra.mxu0 %v461
  %1190 = vmatpush.bf16.msra.mxu0 %v458
  %1191 = vmatmul.bf16.gmra.mxu0 %v1156
  %v1192 = vpop.f32.mrf.mxu0
  %v1193 = vadd.f32 0.0, %v1192
  %v1194 = vpop.f32.mrf.mxu0
  %1195 = vdwg.mxu0
  %v1196 = vadd.f32 %v1153, %v1167
  %v1197 = vxor.u32 %v1196, 2147483648
  %v1198 = vmul.f32 %v1197, 1.442695
  %v1199 = vpow.pop %v1198
  %v1200 = vadd.f32 %v1199, 1.0
  %v1201 = vrcp.pop %v1200
  %v1202 = vmul.f32 %v1200, %v1201
  %v1203 = vsub.f32 1.0, %v1202
  %v1204 = vmul.f32 %v1201, %v1203
  %v1205 = vadd.f32 %v1201, %v1204
  %vm1206 = vweird.f32 %v1200
  %vm1207 = vweird.f32 %v1201
  %vm1208 = vmor %vm1206, %vm1207
  %v1209 = vsel %vm1208, %v1201, %v1205
  %v1210 = vand.u32 2147483647, %v1200
  %vm1211 = vcmp.eq.f32.partialorder %v1210, 8.507059e+37
  %v1212 = vand.u32 %v1200, 2147483648
  %v1213 = vor.u32 1.1754944e-38, %v1212
  %v1214 = vsel %vm1211, %v1213, %v1209
  %v1215 = vmul.f32 1.0, %v1214
  %v1216 = vadd.f32 %v1154, %v1180
  %v1217 = vxor.u32 %v1216, 2147483648
  %v1218 = vmul.f32 %v1217, 1.442695
  %v1219 = vpow.pop %v1218
  %v1220 = vadd.f32 %v1219, 1.0
  %v1221 = vrcp.pop %v1220
  %v1222 = vmul.f32 %v1220, %v1221
  %v1223 = vsub.f32 1.0, %v1222
  %v1224 = vmul.f32 %v1221, %v1223
  %v1225 = vadd.f32 %v1221, %v1224
  %vm1226 = vweird.f32 %v1220
  %vm1227 = vweird.f32 %v1221
  %vm1228 = vmor %vm1226, %vm1227
  %v1229 = vsel %vm1228, %v1221, %v1225
  %v1230 = vand.u32 2147483647, %v1220
  %vm1231 = vcmp.eq.f32.partialorder %v1230, 8.507059e+37
  %v1232 = vand.u32 %v1220, 2147483648
  %v1233 = vor.u32 1.1754944e-38, %v1232
  %v1234 = vsel %vm1231, %v1233, %v1229
  %v1235 = vmul.f32 1.0, %v1234
  %v1236 = vadd.f32 %v1193, %v584
  %v1237 = vmul.f32 %v1215, %v1236
  %v1238 = vadd.f32 %v1155, %v1237
  %v1239 = vtanh.pop %v1238
  %v1240 = vsub.f32 %v1149, %v1239
  %v1241 = vmul.f32 %v1235, %v1240
  %v1242 = vadd.f32 %v1239, %v1241
  %s1243 = scalar_lea.vmem [#allocation3], 56
  %1244 = vst [vmem:[%s1243] sm:$0xff] %v1242
  %v1245 = vld [vmem:[#allocation3] sm:$0xff]
  %v1246 = vld [vmem:[#allocation3 + $0x8] sm:$0xff]
  %v1247 = vld [vmem:[#allocation3 + $0x10] sm:$0xff]
  %v1248 = vld [vmem:[#allocation3 + $0x18] sm:$0xff]
  %v1249 = vld [vmem:[#allocation3 + $0x20] sm:$0xff]
  %v1250 = vld [vmem:[#allocation3 + $0x28] sm:$0xff]
  %v1251 = vld [vmem:[#allocation3 + $0x30] sm:$0xff]
  %v1252 = vld [vmem:[#allocation3 + $0x38] sm:$0xff]
  %v1253 = vld [vmem:[%s5] sm:$0x1]
  %v1255 = vperm.slane %v1253, 0
  %v1257 = vmul.f32 %v1245, %v1255
  %v1258 = vmul.f32 %v1246, %v1255
  %v1259 = vmul.f32 %v1247, %v1255
  %v1260 = vmul.f32 %v1248, %v1255
  %v1261 = vmul.f32 %v1249, %v1255
  %v1262 = vmul.f32 %v1250, %v1255
  %v1263 = vmul.f32 %v1251, %v1255
  %v1264 = vmul.f32 %v1252, %v1255
  %1265 = vadd.xlane.f32.xlu0 %v1257
  %v1266 = vpop.xlane.xlu0 %1265
  %1267 = vadd.xlane.f32.xlu0 %v1258
  %v1268 = vpop.xlane.xlu0 %1267
  %1269 = vadd.xlane.f32.xlu0 %v1259
  %v1270 = vpop.xlane.xlu0 %1269
  %1271 = vadd.xlane.f32.xlu0 %v1260
  %v1272 = vpop.xlane.xlu0 %1271
  %1273 = vadd.xlane.f32.xlu0 %v1261
  %v1274 = vpop.xlane.xlu0 %1273
  %1275 = vadd.xlane.f32.xlu0 %v1262
  %v1276 = vpop.xlane.xlu0 %1275
  %1277 = vadd.xlane.f32.xlu0 %v1263
  %v1278 = vpop.xlane.xlu0 %1277
  %1279 = vadd.xlane.f32.xlu0 %v1264
  %v1280 = vpop.xlane.xlu0 %1279
  %v1281 = vld [vmem:[#allocation4] sm:$0x1]
  %s1282 = vtos %v1281
  %v1283 = vstv %s1282
  %v1284 = vadd.f32 %v1266, %v1283
  %v1285 = vadd.f32 %v1268, %v1283
  %v1286 = vadd.f32 %v1270, %v1283
  %v1287 = vadd.f32 %v1272, %v1283
  %v1288 = vadd.f32 %v1274, %v1283
  %v1289 = vadd.f32 %v1276, %v1283
  %v1290 = vadd.f32 %v1278, %v1283
  %v1291 = vadd.f32 %v1280, %v1283
  %v1292 = vmax.f32 %v1284, %v1288
  %v1293 = vmax.f32 %v1285, %v1289
  %v1294 = vmax.f32 %v1286, %v1290
  %v1295 = vmax.f32 %v1287, %v1291
  %v1296 = vmax.f32 %v1292, %v1293
  %v1297 = vmax.f32 %v1294, %v1295
  %v1298 = vmax.f32 %v1296, %v1297
  %v1299 = vsub.f32 %v1284, %v1298
  %v1300 = vsub.f32 %v1285, %v1298
  %v1301 = vsub.f32 %v1286, %v1298
  %v1302 = vsub.f32 %v1287, %v1298
  %v1303 = vsub.f32 %v1288, %v1298
  %v1304 = vsub.f32 %v1289, %v1298
  %v1305 = vsub.f32 %v1290, %v1298
  %v1306 = vsub.f32 %v1291, %v1298
  %v1307 = vmul.f32 %v1299, 1.442695
  %v1308 = vpow.pop %v1307
  %v1309 = vmul.f32 %v1300, 1.442695
  %v1310 = vpow.pop %v1309
  %v1311 = vmul.f32 %v1301, 1.442695
  %v1312 = vpow.pop %v1311
  %v1313 = vmul.f32 %v1302, 1.442695
  %v1314 = vpow.pop %v1313
  %v1315 = vmul.f32 %v1303, 1.442695
  %v1316 = vpow.pop %v1315
  %v1317 = vmul.f32 %v1304, 1.442695
  %v1318 = vpow.pop %v1317
  %v1319 = vmul.f32 %v1305, 1.442695
  %v1320 = vpow.pop %v1319
  %v1321 = vmul.f32 %v1306, 1.442695
  %v1322 = vpow.pop %v1321
  %v1323 = vadd.f32 %v1308, %v1310
  %v1324 = vadd.f32 %v1323, %v1312
  %v1325 = vadd.f32 %v1324, %v1314
  %v1326 = vadd.f32 %v1325, %v1316
  %v1327 = vadd.f32 %v1326, %v1318
  %v1328 = vadd.f32 %v1327, %v1320
  %v1329 = vadd.f32 %v1328, %v1322
  %v1330 = vrcp.pop %v1329
  %v1331 = vmul.f32 %v1308, %v1330
  %v1332 = vmul.f32 %v1310, %v1330
  %v1333 = vmul.f32 %v1312, %v1330
  %v1334 = vmul.f32 %v1314, %v1330
  %v1335 = vmul.f32 %v1316, %v1330
  %v1336 = vmul.f32 %v1318, %v1330
  %v1337 = vmul.f32 %v1320, %v1330
  %v1338 = vmul.f32 %v1322, %v1330
  %v1339 = vmul.f32 %v1245, %v1331
  %v1340 = vmul.f32 %v1246, %v1332
  %v1341 = vmul.f32 %v1247, %v1333
  %v1342 = vmul.f32 %v1248, %v1334
  %v1343 = vmul.f32 %v1249, %v1335
  %v1344 = vmul.f32 %v1250, %v1336
  %v1345 = vmul.f32 %v1251, %v1337
  %v1346 = vmul.f32 %v1252, %v1338
  %v1347 = vadd.f32 %v1339, %v1340
  %v1348 = vadd.f32 %v1347, %v1341
  %v1349 = vadd.f32 %v1348, %v1342
  %v1350 = vadd.f32 %v1349, %v1343
  %v1351 = vadd.f32 %v1350, %v1344
  %v1352 = vadd.f32 %v1351, %v1345
  %v1353 = vadd.f32 %v1352, %v1346
  %v1354 = vpack.c.bf16 %v1353, %v1353
  %1355 = vst [vmem:[%s7] sm:$0xf] %v1354
  // Predicated region
  $region30: #{session_recommender_forward.2} parent=0 // pred_check
    _
  $region31: #{session_recommender_forward.2} parent=0 // pred_check_branch
    %1357 = sbr.rel (0) target = $region33
  $region32: #{session_recommender_forward.2} parent=0 // pred_region
    _
  $region33: #{session_recommender_forward.2} parent=0 // pred_fallthru
    _
  // Predicated region
  $region34: #{session_recommender_forward.2} parent=0 // pred_check
    _
  $region35: #{session_recommender_forward.2} parent=0 // pred_check_branch
    %1359 = sbr.rel (0) target = $region37
  $region36: #{session_recommender_forward.2} parent=0 // pred_region
    _
  $region37: #{session_recommender_forward.2} parent=0 // pred_fallthru
    _

</llo_original>
